<compile_context>
chip_gen: v6e
topology: v6e:2x2x1
jax: 0.10.0
libtpu: 0.0.40
codegen_flags: <defaults>
</compile_context>

<pallas_src>
import math
import functools

import jax
import jax.numpy as jnp
from jax.experimental import pallas as pl
from jax.experimental.pallas import tpu as pltpu

EPS = 1e-5       # PyTorch LayerNorm default eps
LANE = 128


def _round_up(x, m):
    return (x + m - 1) // m * m


def _pad2(w, rows, cols, dtype=None):
    w = jnp.pad(w, ((0, rows - w.shape[0]), (0, cols - w.shape[1])))
    return w if dtype is None else w.astype(dtype)


# --------------------------------------------------------------------------------------
# Kernels
# --------------------------------------------------------------------------------------

def transformer_body_kernel(
    u_ref, pos_ref,
    wqkv_ref, bqkv_ref, wo_ref, bo_ref,
    w1_ref, b1_ref, w2_ref, b2_ref,
    g1_ref, be1_ref, g2_ref, be2_ref,
    pooled_ref,
    *, e_true,
):
    f32 = jnp.float32
    bt, seq, ep = u_ref.shape
    cdt = wqkv_ref.dtype                        # matmul operand dtype (bf16 or f32)

    # 0/1 mask of the real (unpadded) lanes; f32 so masking is a cheap VPU multiply.
    lane_mask = (jax.lax.broadcasted_iota(jnp.int32, (1, ep), 1) < e_true).astype(f32)

    def layernorm(z, gamma, beta):
        # z is exactly zero in the padded lanes; biased stats over the e_true real lanes.
        inv_n = 1.0 / e_true
        mean = jnp.sum(z, axis=-1, keepdims=True) * inv_n
        xc = (z - mean) * lane_mask
        var = jnp.sum(xc * xc, axis=-1, keepdims=True) * inv_n
        # gamma/beta are zero-padded -> padded output lanes stay exactly 0.
        return xc * jax.lax.rsqrt(var + EPS) * gamma + beta

    # --- embedding (+ positional embedding); streamed in cdt, math in f32 -------------
    x = (u_ref[...].astype(f32) + pos_ref[...].astype(f32)).reshape(bt * seq, ep)

    # --- fused Q/K/V projection: one (bt*S, Ep) x (Ep, 3Ep) MXU pass.  The 1/sqrt(E)
    #     attention scale is pre-folded into the Q block of wqkv/bqkv (free at runtime).
    qkv = (jnp.dot(x.astype(cdt), wqkv_ref[...], preferred_element_type=f32)
           + bqkv_ref[...])
    # Lane-tile-aligned slices (ep is a multiple of 128) -> no relayout copies.
    q = qkv[:, 0 * ep:1 * ep].reshape(bt, seq, ep)
    k = qkv[:, 1 * ep:2 * ep].reshape(bt, seq, ep)
    v = qkv[:, 2 * ep:3 * ep].reshape(bt, seq, ep)

    # --- single-head scaled dot-product attention; softmax in f32 ---------------------
    # TODO(synk): flash-tile over KV blocks with online softmax once S is production-
    #             sized; the monolithic (bt, S, S) scores slab is only OK for small S.
    scores = jnp.einsum("bqe,bke->bqk", q.astype(cdt), k.astype(cdt),
                        preferred_element_type=f32)
    m = jnp.max(scores, axis=-1, keepdims=True)
    p = jnp.exp(scores - m)
    denom = jnp.sum(p, axis=-1, keepdims=True)
    r = pl.reciprocal(denom, approx=True)        # EUP slot (otherwise idle)
    r = r * (2.0 - denom * r)                    # one Newton step -> f32-accurate
    p = p * r
    ctx = jnp.einsum("bqk,bke->bqe", p.astype(cdt), v.astype(cdt),
                     preferred_element_type=f32).reshape(bt * seq, ep)
    attn = (jnp.dot(ctx.astype(cdt), wo_ref[...], preferred_element_type=f32)
            + bo_ref[...])

    # --- residual + LayerNorm1 ---------------------------------------------------------
    src = layernorm(x + attn, g1_ref[...], be1_ref[...])

    # --- feed-forward.  The reference re-binds `src` to h, so the second residual is
    #     h + linear2(h)  (requires dim_feedforward == input_size). ----------------------
    # TODO(synk): K-tile linear1/linear2 over F chunks (grid axis + f32 VMEM accumulator)
    #             at production E/F so the weight slabs stream instead of sitting resident.
    h = jnp.maximum(
        jnp.dot(src.astype(cdt), w1_ref[...], preferred_element_type=f32) + b1_ref[...],
        0.0)
    ff = jnp.dot(h.astype(cdt), w2_ref[...], preferred_element_type=f32) + b2_ref[...]
    out = layernorm(h + ff, g2_ref[...], be2_ref[...])

    # --- Transformer head, part 1: sum over the sequence -> lane-dense (bt, Ep) --------
    pooled_ref[...] = jnp.sum(out.reshape(bt, seq, ep), axis=1).astype(pooled_ref.dtype)


def vocab_head_kernel(pooled_ref, wlin_ref, o_ref):
    # pooled (B, Ep) f32 x wlin tile (Ep, block_v) cdt -> lane-dense (B, block_v) f32.
    cdt = wlin_ref.dtype
    o_ref[...] = jnp.dot(pooled_ref[...].astype(cdt), wlin_ref[...],
                         preferred_element_type=jnp.float32).astype(o_ref.dtype)


# --------------------------------------------------------------------------------------
# Wrapper
# --------------------------------------------------------------------------------------

def prepare_params(params, matmul_dtype=jnp.bfloat16):
    """Pad / cast / scale-fold all weights ONCE (hoisted out of the per-call path)."""
    emb, pos = params["emb"], params["pos"]
    V, E = emb.shape
    S = pos.shape[0]
    F = params["w1"].shape[1]
    # The reference forward adds h + linear2(h); it only runs when F == E.
    assert F == E, "reference TransformerLayer requires dim_feedforward == input_size"
    Ep, Vp = _round_up(E, LANE), _round_up(V, LANE)
    cdt = matmul_dtype
    scale = 1.0 / math.sqrt(E)

    # Fold the 1/sqrt(E) attention scale into the Q projection (zero runtime cost).
    wq_s = params["wq"] * scale
    bq_s = params["bq"] * scale

    wqkv = jnp.concatenate(
        [_pad2(w, Ep, Ep, cdt) for w in (wq_s, params["wk"], params["wv"])], axis=1)
    bqkv = jnp.concatenate(
        [_pad2(b, 1, Ep) for b in (bq_s, params["bk"], params["bv"])], axis=1)

    return dict(
        meta=dict(V=V, E=E, S=S, Ep=Ep, Vp=Vp, cdt=cdt),
        emb=params["emb"].astype(cdt),            # gather reads cdt rows (bf16 halves DMA)
        pos=_pad2(pos, S, Ep, cdt),
        wqkv=wqkv, bqkv=bqkv,
        wo=_pad2(params["wo"], Ep, Ep, cdt), bo=_pad2(params["bo"], 1, Ep),
        w1=_pad2(params["w1"], Ep, Ep, cdt), b1=_pad2(params["b1"], 1, Ep),
        w2=_pad2(params["w2"], Ep, Ep, cdt), b2=_pad2(params["b2"], 1, Ep),
        g1=_pad2(params["g1"], 1, Ep), be1=_pad2(params["be1"], 1, Ep),
        g2=_pad2(params["g2"], 1, Ep), be2=_pad2(params["be2"], 1, Ep),
        wlin=_pad2(params["wlin"], Ep, Vp, cdt),
    )


def _choose_block_b(B, S, target_rows=256):
    """Batch tile so block_b*S fills the MXU (>=256 rows) and nb >= 2 (v7x megacore),
    subject to the sublane constraint (block_b multiple of 8, or block_b == B)."""
    cands = [b for b in range(8, B, 8) if B % b == 0]
    good = [b for b in cands if b * S >= target_rows]
    if good:
        return min(good)          # smallest tile that still fills the MXU -> more nb
    if cands:
        return max(cands)         # at least keep nb >= 2
    return B                      # tiny B (e.g. the toy test): one grid step


def _choose_block_v(Vp, target=2048):
    """Largest lane-dense (multiple of 128) vocab tile <= target that divides Vp."""
    if Vp <= target:
        return Vp
    best = LANE
    for c in range(LANE, target + 1, LANE):
        if Vp % c == 0:
            best = c
    return best


def _vmem_limit_bytes(required_bytes):
    """Per-generation VMEM budget: computed need (with headroom) capped by capacity."""
    try:
        cap = int(pltpu.get_tpu_info().vmem_capacity_bytes)
    except Exception:  # pragma: no cover - conservative fallback (v7x per-TC)
        cap = 64 << 20
    cap = int(cap * 0.85)                   # headroom for Mosaic-internal scratch
    return int(max(4 << 20, min(int(required_bytes), cap)))


def transformer_forward(ids, prepared, *, block_b=None, block_v=None):
    """Full Transformer forward. ids: (B, S) int32 token ids; prepared=prepare_params()."""
    meta = prepared["meta"]
    V, E, S, Ep, Vp, cdt = (meta[k] for k in ("V", "E", "S", "Ep", "Vp", "cdt"))
    B, S_in = ids.shape
    assert S_in == S
    csz = jnp.dtype(cdt).itemsize

    # TODO(synk): the data-dependent nn.Embedding gather stays in XLA (jnp.take); only
    # the gathered (B,S,E) rows are padded to the lane width (never the (V,E) table).
    u = jnp.take(prepared["emb"], ids, axis=0)                   # (B, S, E) in cdt
    u = jnp.pad(u, ((0, 0), (0, 0), (0, Ep - E)))                # (B, S, Ep)

    if block_b is None:
        block_b = _choose_block_b(B, S)
    assert B % block_b == 0 and (block_b == B or block_b % 8 == 0)
    nb = B // block_b

    def full(shape):
        return pl.BlockSpec(shape, lambda b: (0,) * len(shape))

    # VMEM budget for the body: double-buffered streamed activations + (conservatively
    # double-counted) resident weights + f32 intermediates, with 25% headroom.
    rows = block_b * S
    act_bytes = 2 * rows * Ep * csz + 2 * S * Ep * csz
    weight_bytes = 2 * (6 * Ep * Ep * csz + 10 * Ep * 4)
    inter_bytes = 4 * rows * (16 * Ep + 2 * S) + 2 * block_b * Ep * 4
    body_vmem = _vmem_limit_bytes(1.25 * (act_bytes + weight_bytes + inter_bytes))

    pooled = pl.pallas_call(
        functools.partial(transformer_body_kernel, e_true=E),
        out_shape=jax.ShapeDtypeStruct((B, Ep), jnp.float32),
        grid=(nb,),
        in_specs=[
            pl.BlockSpec((block_b, S, Ep), lambda b: (b, 0, 0)),   # streamed activations
            full((S, Ep)),                                         # positional embedding
            full((Ep, 3 * Ep)), full((1, 3 * Ep)),                 # fused (scaled-Q) QKV
            full((Ep, Ep)), full((1, Ep)),                         # out_proj
            full((Ep, Ep)), full((1, Ep)),                         # linear1
            full((Ep, Ep)), full((1, Ep)),                         # linear2
            full((1, Ep)), full((1, Ep)),                          # norm1 gamma/beta
            full((1, Ep)), full((1, Ep)),                          # norm2 gamma/beta
        ],
        out_specs=pl.BlockSpec((block_b, Ep), lambda b: (b, 0)),
        compiler_params=pltpu.CompilerParams(
            dimension_semantics=("parallel",),      # batch tiles shard across TCs (v7x)
            vmem_limit_bytes=body_vmem,
        ),
    )(u, prepared["pos"], prepared["wqkv"], prepared["bqkv"],
      prepared["wo"], prepared["bo"], prepared["w1"], prepared["b1"],
      prepared["w2"], prepared["b2"], prepared["g1"], prepared["be1"],
      prepared["g2"], prepared["be2"])

    # Vocab head: separate V-tiled matmul so wlin streams in lane-dense tiles instead of
    # sitting (double-buffered) resident in VMEM at production vocab sizes.
    if block_v is None:
        block_v = _choose_block_v(Vp)
    nv = Vp // block_v
    head_vmem = _vmem_limit_bytes(1.25 * (
        2 * B * Ep * 4 + 2 * Ep * block_v * csz + 3 * B * block_v * 4))

    logits = pl.pallas_call(
        vocab_head_kernel,
        out_shape=jax.ShapeDtypeStruct((B, Vp), jnp.float32),
        grid=(nv,),
        in_specs=[
            pl.BlockSpec((B, Ep), lambda v: (0, 0)),        # pooled (grid-invariant)
            pl.BlockSpec((Ep, block_v), lambda v: (0, v)),  # streamed wlin vocab tile
        ],
        out_specs=pl.BlockSpec((B, block_v), lambda v: (0, v)),
        compiler_params=pltpu.CompilerParams(
            dimension_semantics=("parallel",),
            vmem_limit_bytes=head_vmem,
        ),
    )(pooled, prepared["wlin"])

    return logits[:, :V]


# --------------------------------------------------------------------------------------
# Parameter construction + pure-JAX reference
# --------------------------------------------------------------------------------------

def make_params(key, V, E, S):
    ks = jax.random.split(key, 10)

    def linear(k, fan_in, fan_out, bias=True):
        bound = 1.0 / math.sqrt(fan_in)
        w = jax.random.uniform(k, (fan_in, fan_out), jnp.float32, -bound, bound)
        if not bias:
            return w
        b = jax.random.uniform(jax.random.fold_in(k, 1), (1, fan_out), jnp.float32,
                               -bound, bound)
        return w, b

    wq, bq = linear(ks[0], E, E)
    wk, bk = linear(ks[1], E, E)
    wv, bv = linear(ks[2], E, E)
    wo, bo = linear(ks[3], E, E)
    w1, b1 = linear(ks[4], E, E)        # dim_feedforward == E (required by the forward)
    w2, b2 = linear(ks[5], E, E)
    emb = jax.random.normal(ks[6], (V, E), jnp.float32)
    emb = emb.at[0].set(0.0)            # padding_idx=0
    pos = jax.random.normal(ks[7], (S, E), jnp.float32)
    wlin = linear(ks[8], E, V, bias=False)
    # LayerNorm affine params perturbed from (1, 0) so that path is exercised.
    g1 = 1.0 + 0.1 * jax.random.normal(jax.random.fold_in(ks[9], 0), (1, E), jnp.float32)
    be1 = 0.1 * jax.random.normal(jax.random.fold_in(ks[9], 1), (1, E), jnp.float32)
    g2 = 1.0 + 0.1 * jax.random.normal(jax.random.fold_in(ks[9], 2), (1, E), jnp.float32)
    be2 = 0.1 * jax.random.normal(jax.random.fold_in(ks[9], 3), (1, E), jnp.float32)
    return dict(emb=emb, pos=pos, wq=wq, bq=bq, wk=wk, bk=bk, wv=wv, bv=bv,
                wo=wo, bo=bo, w1=w1, b1=b1, w2=w2, b2=b2,
                g1=g1, be1=be1, g2=g2, be2=be2, wlin=wlin)


def reference_forward(ids, params, matmul_dtype=jnp.float32):
    """Pure-JAX reference with matmul-operand precision matched to the kernel
    (f32 accumulation, activations streamed in matmul_dtype, 1/sqrt(E) folded into Q —
    mathematically identical to the PyTorch module)."""
    f32 = jnp.float32
    cdt = matmul_dtype
    mm = lambda a, b: jnp.dot(a.astype(cdt), b.astype(cdt), preferred_element_type=f32)

    def ln(z, g, b):
        mu = jnp.mean(z, axis=-1, keepdims=True)
        var = jnp.mean((z - mu) ** 2, axis=-1, keepdims=True)
        return (z - mu) * jax.lax.rsqrt(var + EPS) * g + b

    E = params["emb"].shape[1]
    scale = 1.0 / math.sqrt(E)
    x = (params["emb"][ids].astype(cdt).astype(f32)
         + params["pos"].astype(cdt).astype(f32))                 # (B, S, E)
    q = mm(x, params["wq"] * scale) + params["bq"] * scale
    k = mm(x, params["wk"]) + params["bk"]
    v = mm(x, params["wv"]) + params["bv"]
    s = jnp.einsum("bqe,bke->bqk", q.astype(cdt), k.astype(cdt),
                   preferred_element_type=f32)
    p = jax.nn.softmax(s, axis=-1)
    ctx = jnp.einsum("bqk,bke->bqe", p.astype(cdt), v.astype(cdt),
                     preferred_element_type=f32)
    attn = mm(ctx, params["wo"]) + params["bo"]
    src = ln(x + attn, params["g1"], params["be1"])
    h = jax.nn.relu(mm(src, params["w1"]) + params["b1"])
    # Literal reference semantics: second residual is h + linear2(h).
    out = ln(h + mm(h, params["w2"]) + params["b2"], params["g2"], params["be2"])
    pooled = out.sum(axis=1)                                       # (B, E)
    return mm(pooled, params["wlin"])                              # (B, V)


if __name__ == "__main__":
    key = jax.random.PRNGKey(0)
    k_ids, k_par = jax.random.split(key)

    # batch, context_words, embedding_dim (== dim_feedforward, see note above), vocab
    B, S, E, V = 2, 8, 32, 100
    params = make_params(k_par, V, E, S)
    ids = jax.random.randint(k_ids, (B, S), 0, V, dtype=jnp.int32)

    # f32 matmul path: tight parity with the fp32 PyTorch module semantics.
    prep32 = prepare_params(params, matmul_dtype=jnp.float32)
    out32 = jax.block_until_ready(transformer_forward(ids, prep32))
    ref32 = reference_forward(ids, params, matmul_dtype=jnp.float32)
    assert out32.shape == (B, V)
    assert jnp.allclose(out32, ref32, atol=1e-3, rtol=1e-3), \
        float(jnp.max(jnp.abs(out32 - ref32)))

    # bf16 MXU operands + bf16-streamed activations (f32 accumulation): the performance
    # configuration, checked against a matched-precision reference.
    prep16 = prepare_params(params, matmul_dtype=jnp.bfloat16)
    out16 = jax.block_until_ready(transformer_forward(ids, prep16))
    ref16 = reference_forward(ids, params, matmul_dtype=jnp.bfloat16)
    assert out16.shape == (B, V)
    assert jnp.allclose(out16, ref16, atol=1e-2, rtol=1e-2), \
        float(jnp.max(jnp.abs(out16 - ref16)))

    print("KERNEL_OK")
</pallas_src>

<mosaic_0001>
module attributes {stable_mosaic.version = 11 : i64} {
  func.func @transformer_body_kernel(%arg0: i32, %arg1: memref<2x8x128xf32, #tpu.memory_space<vmem>>, %arg2: memref<8x128xf32, #tpu.memory_space<vmem>>, %arg3: memref<128x384xf32, #tpu.memory_space<vmem>>, %arg4: memref<1x384xf32, #tpu.memory_space<vmem>>, %arg5: memref<128x128xf32, #tpu.memory_space<vmem>>, %arg6: memref<1x128xf32, #tpu.memory_space<vmem>>, %arg7: memref<128x128xf32, #tpu.memory_space<vmem>>, %arg8: memref<1x128xf32, #tpu.memory_space<vmem>>, %arg9: memref<128x128xf32, #tpu.memory_space<vmem>>, %arg10: memref<1x128xf32, #tpu.memory_space<vmem>>, %arg11: memref<1x128xf32, #tpu.memory_space<vmem>>, %arg12: memref<1x128xf32, #tpu.memory_space<vmem>>, %arg13: memref<1x128xf32, #tpu.memory_space<vmem>>, %arg14: memref<1x128xf32, #tpu.memory_space<vmem>>, %arg15: memref<2x128xf32, #tpu.memory_space<vmem>>) attributes {dimension_semantics = [#tpu.dimension_semantics<parallel>], iteration_bounds = array<i64: 1>, scalar_prefetch = 0 : i64, scratch_operands = 0 : i64, tpu.core_type = #tpu.core_type<tc>, window_params = [{transform_indices = @transform_0, window_bounds = array<i64: 2, 8, 128>}, {pipeline_mode = #tpu.pipeline_mode<synchronous>, transform_indices = @transform_1, window_bounds = array<i64: 8, 128>}, {pipeline_mode = #tpu.pipeline_mode<synchronous>, transform_indices = @transform_2, window_bounds = array<i64: 128, 384>}, {pipeline_mode = #tpu.pipeline_mode<synchronous>, transform_indices = @transform_3, window_bounds = array<i64: 1, 384>}, {pipeline_mode = #tpu.pipeline_mode<synchronous>, transform_indices = @transform_4, window_bounds = array<i64: 128, 128>}, {pipeline_mode = #tpu.pipeline_mode<synchronous>, transform_indices = @transform_5, window_bounds = array<i64: 1, 128>}, {pipeline_mode = #tpu.pipeline_mode<synchronous>, transform_indices = @transform_6, window_bounds = array<i64: 128, 128>}, {pipeline_mode = #tpu.pipeline_mode<synchronous>, transform_indices = @transform_7, window_bounds = array<i64: 1, 128>}, {pipeline_mode = #tpu.pipeline_mode<synchronous>, transform_indices = @transform_8, window_bounds = array<i64: 128, 128>}, {pipeline_mode = #tpu.pipeline_mode<synchronous>, transform_indices = @transform_9, window_bounds = array<i64: 1, 128>}, {pipeline_mode = #tpu.pipeline_mode<synchronous>, transform_indices = @transform_10, window_bounds = array<i64: 1, 128>}, {pipeline_mode = #tpu.pipeline_mode<synchronous>, transform_indices = @transform_11, window_bounds = array<i64: 1, 128>}, {pipeline_mode = #tpu.pipeline_mode<synchronous>, transform_indices = @transform_12, window_bounds = array<i64: 1, 128>}, {pipeline_mode = #tpu.pipeline_mode<synchronous>, transform_indices = @transform_13, window_bounds = array<i64: 1, 128>}, {transform_indices = @transform_14, window_bounds = array<i64: 2, 128>}]} {
    %0 = tpu.iota {dimensions = array<i32: 1>} : vector<1x128xi32>
    %c32_i32 = arith.constant 32 : i32
    %1 = vector.broadcast %c32_i32 : i32 to vector<1x128xi32>
    %2 = arith.cmpi slt, %0, %1 : vector<1x128xi32>
    %3 = arith.extui %2 : vector<1x128xi1> to vector<1x128xi32>
    %4 = arith.sitofp %3 : vector<1x128xi32> to vector<1x128xf32>
    %c0 = arith.constant 0 : index
    %c0_0 = arith.constant 0 : index
    %c0_1 = arith.constant 0 : index
    %5 = vector.load %arg1[%c0, %c0_0, %c0_1] : memref<2x8x128xf32, #tpu.memory_space<vmem>>, vector<2x8x128xf32>
    %c0_2 = arith.constant 0 : index
    %c0_3 = arith.constant 0 : index
    %6 = vector.load %arg2[%c0_2, %c0_3] : memref<8x128xf32, #tpu.memory_space<vmem>>, vector<8x128xf32>
    %7 = vector.shape_cast %6 : vector<8x128xf32> to vector<1x8x128xf32>
    %8 = vector.broadcast %7 : vector<1x8x128xf32> to vector<2x8x128xf32>
    %9 = arith.addf %5, %8 : vector<2x8x128xf32>
    %10 = vector.shape_cast %9 : vector<2x8x128xf32> to vector<16x128xf32>
    %c0_4 = arith.constant 0 : index
    %c0_5 = arith.constant 0 : index
    %11 = vector.load %arg3[%c0_4, %c0_5] : memref<128x384xf32, #tpu.memory_space<vmem>>, vector<128x384xf32>
    %cst = arith.constant dense<0.000000e+00> : vector<16x384xf32>
    %12 = tpu.matmul %10, %11, %cst {dimension_numbers = #tpu.dot_dimension_numbers<[1], [0], [0], [1], [0, 0, 1, 1], [], []>} : vector<16x128xf32>, vector<128x384xf32>, vector<16x384xf32> -> vector<16x384xf32>
    %c0_6 = arith.constant 0 : index
    %c0_7 = arith.constant 0 : index
    %13 = vector.load %arg4[%c0_6, %c0_7] : memref<1x384xf32, #tpu.memory_space<vmem>>, vector<1x384xf32>
    %14 = vector.broadcast %13 : vector<1x384xf32> to vector<16x384xf32>
    %15 = arith.addf %12, %14 : vector<16x384xf32>
    %16 = vector.extract_strided_slice %15 {offsets = [0, 0], sizes = [16, 128], strides = [1, 1]} : vector<16x384xf32> to vector<16x128xf32>
    %17 = vector.shape_cast %16 : vector<16x128xf32> to vector<2x8x128xf32>
    %18 = vector.extract_strided_slice %15 {offsets = [0, 128], sizes = [16, 128], strides = [1, 1]} : vector<16x384xf32> to vector<16x128xf32>
    %19 = vector.shape_cast %18 : vector<16x128xf32> to vector<2x8x128xf32>
    %20 = vector.extract_strided_slice %15 {offsets = [0, 256], sizes = [16, 128], strides = [1, 1]} : vector<16x384xf32> to vector<16x128xf32>
    %21 = vector.shape_cast %20 : vector<16x128xf32> to vector<2x8x128xf32>
    "tpu.trace_start"() <{level = 10 : i32, message = "bqe,bke->bqk"}> : () -> ()
    %cst_8 = arith.constant dense<0.000000e+00> : vector<2x8x8xf32>
    %22 = tpu.matmul %17, %19, %cst_8 {dimension_numbers = #tpu.dot_dimension_numbers<[2], [2], [1], [1], [0, 0, 0, 1, 1, 1], [0], [0]>} : vector<2x8x128xf32>, vector<2x8x128xf32>, vector<2x8x8xf32> -> vector<2x8x8xf32>
    "tpu.trace_stop"() : () -> ()
    %cst_9 = arith.constant dense<0xFF800000> : vector<2x8xf32>
    %23 = vector.multi_reduction <maximumf>, %22, %cst_9 [2] : vector<2x8x8xf32> to vector<2x8xf32>
    %24 = vector.shape_cast %23 : vector<2x8xf32> to vector<2x8x1xf32>
    %25 = vector.broadcast %24 : vector<2x8x1xf32> to vector<2x8x8xf32>
    %26 = arith.subf %22, %25 : vector<2x8x8xf32>
    %27 = math.exp %26 : vector<2x8x8xf32>
    %cst_10 = arith.constant dense<0.000000e+00> : vector<2x8xf32>
    %28 = vector.multi_reduction <add>, %27, %cst_10 [2] : vector<2x8x8xf32> to vector<2x8xf32>
    %29 = vector.shape_cast %28 : vector<2x8xf32> to vector<2x8x1xf32>
    %30 = tpu.reciprocal %29 {approx = true} : vector<2x8x1xf32> -> vector<2x8x1xf32>
    %31 = arith.mulf %29, %30 : vector<2x8x1xf32>
    %cst_11 = arith.constant 2.000000e+00 : f32
    %32 = vector.broadcast %cst_11 : f32 to vector<2x8x1xf32>
    %33 = arith.subf %32, %31 : vector<2x8x1xf32>
    %34 = arith.mulf %30, %33 : vector<2x8x1xf32>
    %35 = vector.broadcast %34 : vector<2x8x1xf32> to vector<2x8x8xf32>
    %36 = arith.mulf %27, %35 : vector<2x8x8xf32>
    "tpu.trace_start"() <{level = 10 : i32, message = "bqk,bke->bqe"}> : () -> ()
    %cst_12 = arith.constant dense<0.000000e+00> : vector<2x8x128xf32>
    %37 = tpu.matmul %36, %21, %cst_12 {dimension_numbers = #tpu.dot_dimension_numbers<[2], [1], [1], [2], [0, 0, 0, 1, 1, 2], [0], [0]>} : vector<2x8x8xf32>, vector<2x8x128xf32>, vector<2x8x128xf32> -> vector<2x8x128xf32>
    "tpu.trace_stop"() : () -> ()
    %38 = vector.shape_cast %37 : vector<2x8x128xf32> to vector<16x128xf32>
    %c0_13 = arith.constant 0 : index
    %c0_14 = arith.constant 0 : index
    %39 = vector.load %arg5[%c0_13, %c0_14] : memref<128x128xf32, #tpu.memory_space<vmem>>, vector<128x128xf32>
    %cst_15 = arith.constant dense<0.000000e+00> : vector<16x128xf32>
    %40 = tpu.matmul %38, %39, %cst_15 {dimension_numbers = #tpu.dot_dimension_numbers<[1], [0], [0], [1], [0, 0, 1, 1], [], []>} : vector<16x128xf32>, vector<128x128xf32>, vector<16x128xf32> -> vector<16x128xf32>
    %c0_16 = arith.constant 0 : index
    %c0_17 = arith.constant 0 : index
    %41 = vector.load %arg6[%c0_16, %c0_17] : memref<1x128xf32, #tpu.memory_space<vmem>>, vector<1x128xf32>
    %42 = vector.broadcast %41 : vector<1x128xf32> to vector<16x128xf32>
    %43 = arith.addf %40, %42 : vector<16x128xf32>
    %44 = arith.addf %10, %43 : vector<16x128xf32>
    %c0_18 = arith.constant 0 : index
    %c0_19 = arith.constant 0 : index
    %45 = vector.load %arg11[%c0_18, %c0_19] : memref<1x128xf32, #tpu.memory_space<vmem>>, vector<1x128xf32>
    %c0_20 = arith.constant 0 : index
    %c0_21 = arith.constant 0 : index
    %46 = vector.load %arg12[%c0_20, %c0_21] : memref<1x128xf32, #tpu.memory_space<vmem>>, vector<1x128xf32>
    %cst_22 = arith.constant dense<0.000000e+00> : vector<16xf32>
    %47 = vector.multi_reduction <add>, %44, %cst_22 [1] : vector<16x128xf32> to vector<16xf32>
    %48 = vector.shape_cast %47 : vector<16xf32> to vector<16x1xf32>
    %cst_23 = arith.constant 3.125000e-02 : f32
    %49 = vector.broadcast %cst_23 : f32 to vector<16x1xf32>
    %50 = arith.mulf %48, %49 : vector<16x1xf32>
    %51 = vector.broadcast %50 : vector<16x1xf32> to vector<16x128xf32>
    %52 = arith.subf %44, %51 : vector<16x128xf32>
    %53 = vector.broadcast %4 : vector<1x128xf32> to vector<16x128xf32>
    %54 = arith.mulf %52, %53 : vector<16x128xf32>
    %55 = arith.mulf %54, %54 : vector<16x128xf32>
    %cst_24 = arith.constant dense<0.000000e+00> : vector<16xf32>
    %56 = vector.multi_reduction <add>, %55, %cst_24 [1] : vector<16x128xf32> to vector<16xf32>
    %57 = vector.shape_cast %56 : vector<16xf32> to vector<16x1xf32>
    %cst_25 = arith.constant 3.125000e-02 : f32
    %58 = vector.broadcast %cst_25 : f32 to vector<16x1xf32>
    %59 = arith.mulf %57, %58 : vector<16x1xf32>
    %cst_26 = arith.constant 9.99999974E-6 : f32
    %60 = vector.broadcast %cst_26 : f32 to vector<16x1xf32>
    %61 = arith.addf %59, %60 : vector<16x1xf32>
    %62 = math.rsqrt %61 : vector<16x1xf32>
    %63 = vector.broadcast %62 : vector<16x1xf32> to vector<16x128xf32>
    %64 = arith.mulf %54, %63 : vector<16x128xf32>
    %65 = vector.broadcast %45 : vector<1x128xf32> to vector<16x128xf32>
    %66 = arith.mulf %64, %65 : vector<16x128xf32>
    %67 = vector.broadcast %46 : vector<1x128xf32> to vector<16x128xf32>
    %68 = arith.addf %66, %67 : vector<16x128xf32>
    %c0_27 = arith.constant 0 : index
    %c0_28 = arith.constant 0 : index
    %69 = vector.load %arg7[%c0_27, %c0_28] : memref<128x128xf32, #tpu.memory_space<vmem>>, vector<128x128xf32>
    %cst_29 = arith.constant dense<0.000000e+00> : vector<16x128xf32>
    %70 = tpu.matmul %68, %69, %cst_29 {dimension_numbers = #tpu.dot_dimension_numbers<[1], [0], [0], [1], [0, 0, 1, 1], [], []>} : vector<16x128xf32>, vector<128x128xf32>, vector<16x128xf32> -> vector<16x128xf32>
    %c0_30 = arith.constant 0 : index
    %c0_31 = arith.constant 0 : index
    %71 = vector.load %arg8[%c0_30, %c0_31] : memref<1x128xf32, #tpu.memory_space<vmem>>, vector<1x128xf32>
    %72 = vector.broadcast %71 : vector<1x128xf32> to vector<16x128xf32>
    %73 = arith.addf %70, %72 : vector<16x128xf32>
    %cst_32 = arith.constant 0.000000e+00 : f32
    %74 = vector.broadcast %cst_32 : f32 to vector<16x128xf32>
    %75 = arith.maximumf %73, %74 : vector<16x128xf32>
    %c0_33 = arith.constant 0 : index
    %c0_34 = arith.constant 0 : index
    %76 = vector.load %arg9[%c0_33, %c0_34] : memref<128x128xf32, #tpu.memory_space<vmem>>, vector<128x128xf32>
    %cst_35 = arith.constant dense<0.000000e+00> : vector<16x128xf32>
    %77 = tpu.matmul %75, %76, %cst_35 {dimension_numbers = #tpu.dot_dimension_numbers<[1], [0], [0], [1], [0, 0, 1, 1], [], []>} : vector<16x128xf32>, vector<128x128xf32>, vector<16x128xf32> -> vector<16x128xf32>
    %c0_36 = arith.constant 0 : index
    %c0_37 = arith.constant 0 : index
    %78 = vector.load %arg10[%c0_36, %c0_37] : memref<1x128xf32, #tpu.memory_space<vmem>>, vector<1x128xf32>
    %79 = vector.broadcast %78 : vector<1x128xf32> to vector<16x128xf32>
    %80 = arith.addf %77, %79 : vector<16x128xf32>
    %81 = arith.addf %75, %80 : vector<16x128xf32>
    %c0_38 = arith.constant 0 : index
    %c0_39 = arith.constant 0 : index
    %82 = vector.load %arg13[%c0_38, %c0_39] : memref<1x128xf32, #tpu.memory_space<vmem>>, vector<1x128xf32>
    %c0_40 = arith.constant 0 : index
    %c0_41 = arith.constant 0 : index
    %83 = vector.load %arg14[%c0_40, %c0_41] : memref<1x128xf32, #tpu.memory_space<vmem>>, vector<1x128xf32>
    %cst_42 = arith.constant dense<0.000000e+00> : vector<16xf32>
    %84 = vector.multi_reduction <add>, %81, %cst_42 [1] : vector<16x128xf32> to vector<16xf32>
    %85 = vector.shape_cast %84 : vector<16xf32> to vector<16x1xf32>
    %cst_43 = arith.constant 3.125000e-02 : f32
    %86 = vector.broadcast %cst_43 : f32 to vector<16x1xf32>
    %87 = arith.mulf %85, %86 : vector<16x1xf32>
    %88 = vector.broadcast %87 : vector<16x1xf32> to vector<16x128xf32>
    %89 = arith.subf %81, %88 : vector<16x128xf32>
    %90 = vector.broadcast %4 : vector<1x128xf32> to vector<16x128xf32>
    %91 = arith.mulf %89, %90 : vector<16x128xf32>
    %92 = arith.mulf %91, %91 : vector<16x128xf32>
    %cst_44 = arith.constant dense<0.000000e+00> : vector<16xf32>
    %93 = vector.multi_reduction <add>, %92, %cst_44 [1] : vector<16x128xf32> to vector<16xf32>
    %94 = vector.shape_cast %93 : vector<16xf32> to vector<16x1xf32>
    %cst_45 = arith.constant 3.125000e-02 : f32
    %95 = vector.broadcast %cst_45 : f32 to vector<16x1xf32>
    %96 = arith.mulf %94, %95 : vector<16x1xf32>
    %cst_46 = arith.constant 9.99999974E-6 : f32
    %97 = vector.broadcast %cst_46 : f32 to vector<16x1xf32>
    %98 = arith.addf %96, %97 : vector<16x1xf32>
    %99 = math.rsqrt %98 : vector<16x1xf32>
    %100 = vector.broadcast %99 : vector<16x1xf32> to vector<16x128xf32>
    %101 = arith.mulf %91, %100 : vector<16x128xf32>
    %102 = vector.broadcast %82 : vector<1x128xf32> to vector<16x128xf32>
    %103 = arith.mulf %101, %102 : vector<16x128xf32>
    %104 = vector.broadcast %83 : vector<1x128xf32> to vector<16x128xf32>
    %105 = arith.addf %103, %104 : vector<16x128xf32>
    %106 = vector.shape_cast %105 : vector<16x128xf32> to vector<2x8x128xf32>
    %cst_47 = arith.constant dense<0.000000e+00> : vector<2x128xf32>
    %107 = vector.multi_reduction <add>, %106, %cst_47 [1] : vector<2x8x128xf32> to vector<2x128xf32>
    %c0_48 = arith.constant 0 : index
    %c0_49 = arith.constant 0 : index
    %108 = vector.load %arg15[%c0_48, %c0_49] : memref<2x128xf32, #tpu.memory_space<vmem>>, vector<2x128xf32>
    tpu.vector_store %arg15[%c0_48, %c0_49], %107 {strides = array<i32>} : memref<2x128xf32, #tpu.memory_space<vmem>>, vector<2x128xf32>,
    return
  }
  func.func @transform_0(%arg0: i32) -> (i32, i32, i32) {
    %c0_i32 = arith.constant 0 : i32
    %c0_i32_0 = arith.constant 0 : i32
    %c0_i32_1 = arith.constant 0 : i32
    return %arg0, %c0_i32, %c0_i32_0 : i32, i32, i32
  }
  func.func @transform_1(%arg0: i32) -> (i32, i32) {
    %c0_i32 = arith.constant 0 : i32
    %c0_i32_0 = arith.constant 0 : i32
    %c0_i32_1 = arith.constant 0 : i32
    return %c0_i32, %c0_i32_0 : i32, i32
  }
  func.func @transform_2(%arg0: i32) -> (i32, i32) {
    %c0_i32 = arith.constant 0 : i32
    %c0_i32_0 = arith.constant 0 : i32
    %c0_i32_1 = arith.constant 0 : i32
    return %c0_i32, %c0_i32_0 : i32, i32
  }
  func.func @transform_3(%arg0: i32) -> (i32, i32) {
    %c0_i32 = arith.constant 0 : i32
    %c0_i32_0 = arith.constant 0 : i32
    %c0_i32_1 = arith.constant 0 : i32
    return %c0_i32, %c0_i32_0 : i32, i32
  }
  func.func @transform_4(%arg0: i32) -> (i32, i32) {
    %c0_i32 = arith.constant 0 : i32
    %c0_i32_0 = arith.constant 0 : i32
    %c0_i32_1 = arith.constant 0 : i32
    return %c0_i32, %c0_i32_0 : i32, i32
  }
  func.func @transform_5(%arg0: i32) -> (i32, i32) {
    %c0_i32 = arith.constant 0 : i32
    %c0_i32_0 = arith.constant 0 : i32
    %c0_i32_1 = arith.constant 0 : i32
    return %c0_i32, %c0_i32_0 : i32, i32
  }
  func.func @transform_6(%arg0: i32) -> (i32, i32) {
    %c0_i32 = arith.constant 0 : i32
    %c0_i32_0 = arith.constant 0 : i32
    %c0_i32_1 = arith.constant 0 : i32
    return %c0_i32, %c0_i32_0 : i32, i32
  }
  func.func @transform_7(%arg0: i32) -> (i32, i32) {
    %c0_i32 = arith.constant 0 : i32
    %c0_i32_0 = arith.constant 0 : i32
    %c0_i32_1 = arith.constant 0 : i32
    return %c0_i32, %c0_i32_0 : i32, i32
  }
  func.func @transform_8(%arg0: i32) -> (i32, i32) {
    %c0_i32 = arith.constant 0 : i32
    %c0_i32_0 = arith.constant 0 : i32
    %c0_i32_1 = arith.constant 0 : i32
    return %c0_i32, %c0_i32_0 : i32, i32
  }
  func.func @transform_9(%arg0: i32) -> (i32, i32) {
    %c0_i32 = arith.constant 0 : i32
    %c0_i32_0 = arith.constant 0 : i32
    %c0_i32_1 = arith.constant 0 : i32
    return %c0_i32, %c0_i32_0 : i32, i32
  }
  func.func @transform_10(%arg0: i32) -> (i32, i32) {
    %c0_i32 = arith.constant 0 : i32
    %c0_i32_0 = arith.constant 0 : i32
    %c0_i32_1 = arith.constant 0 : i32
    return %c0_i32, %c0_i32_0 : i32, i32
  }
  func.func @transform_11(%arg0: i32) -> (i32, i32) {
    %c0_i32 = arith.constant 0 : i32
    %c0_i32_0 = arith.constant 0 : i32
    %c0_i32_1 = arith.constant 0 : i32
    return %c0_i32, %c0_i32_0 : i32, i32
  }
  func.func @transform_12(%arg0: i32) -> (i32, i32) {
    %c0_i32 = arith.constant 0 : i32
    %c0_i32_0 = arith.constant 0 : i32
    %c0_i32_1 = arith.constant 0 : i32
    return %c0_i32, %c0_i32_0 : i32, i32
  }
  func.func @transform_13(%arg0: i32) -> (i32, i32) {
    %c0_i32 = arith.constant 0 : i32
    %c0_i32_0 = arith.constant 0 : i32
    %c0_i32_1 = arith.constant 0 : i32
    return %c0_i32, %c0_i32_0 : i32, i32
  }
  func.func @transform_14(%arg0: i32) -> (i32, i32) {
    %c0_i32 = arith.constant 0 : i32
    %c0_i32_0 = arith.constant 0 : i32
    return %arg0, %c0_i32 : i32, i32
  }
}

</mosaic_0001>

<llo_original>
// kernel: tpu_custom_call.1
$region0: #{tpu_custom_call.1}
  #allocation0 [shape = 'u32[]', space=smem, size = 0x4, offset = 0x4, fixed_abs, tag = 'smem constant byte address 0x4 - core index']
  #allocation1 [shape = 'u32[144,128]{1,0:T(1,128)}', space=vmem, size = 0x12000, scoped, tag = 'internal scratch']
  %s0 = inlined_call_operand.hbm [shape: f32[2,8,128], index: 0, kind: input, shape index: {}]
  %s1 = inlined_call_operand.hbm [shape: f32[8,128], index: 1, kind: input, shape index: {}]
  %s2 = inlined_call_operand.hbm [shape: f32[128,384], index: 2, kind: input, shape index: {}]
  %s3 = inlined_call_operand.vmem [shape: f32[1,384], index: 3, kind: input, shape index: {}]
  %s4 = inlined_call_operand.hbm [shape: f32[128,128], index: 4, kind: input, shape index: {}]
  %s5 = inlined_call_operand.vmem [shape: f32[1,128], index: 5, kind: input, shape index: {}]
  %s6 = inlined_call_operand.hbm [shape: f32[128,128], index: 6, kind: input, shape index: {}]
  %s7 = inlined_call_operand.vmem [shape: f32[1,128], index: 7, kind: input, shape index: {}]
  %s8 = inlined_call_operand.hbm [shape: f32[128,128], index: 8, kind: input, shape index: {}]
  %s9 = inlined_call_operand.vmem [shape: f32[1,128], index: 9, kind: input, shape index: {}]
  %s10 = inlined_call_operand.vmem [shape: f32[1,128], index: 10, kind: input, shape index: {}]
  %s11 = inlined_call_operand.vmem [shape: f32[1,128], index: 11, kind: input, shape index: {}]
  %s12 = inlined_call_operand.vmem [shape: f32[1,128], index: 12, kind: input, shape index: {}]
  %s13 = inlined_call_operand.vmem [shape: f32[1,128], index: 13, kind: input, shape index: {}]
  %s14 = inlined_call_operand.hbm [shape: f32[2,128], index: 14, kind: output, shape index: {}]
  %s15 = sld [smem:[#allocation0]]
  $region90: #{tpu_custom_call.1} parent=0
    _
  %s17 = ssub.s32 1, %s15
  %s18 = scalar_select 0, %s17, %s15
  $region1: #{tpu_custom_call.1} parent=0
    #allocation2 [shape = 'u8[8192]{0}', space=vmem, size = 0x2000, scoped, tag = 'input window, operand 0, single buffered']
    #allocation3 [shape = 's32[1]{0}', space=sflag, size = 0x4, scoped, tag = 'scoped memory for tpu_custom_call.1']
    #allocation4 [shape = 's32[1]{0}', space=sflag, size = 0x4, scoped, tag = 'scoped memory for tpu_custom_call.1']
    #allocation5 [shape = 'u8[4096]{0}', space=vmem, size = 0x1000, scoped, tag = 'input window, operand 1, single buffered']
    #allocation6 [shape = 's32[1]{0}', space=sflag, size = 0x4, scoped, tag = 'scoped memory for tpu_custom_call.1']
    #allocation7 [shape = 'u8[196608]{0}', space=vmem, size = 0x30000, scoped, tag = 'input window, operand 2, single buffered']
    #allocation8 [shape = 'u8[65536]{0}', space=vmem, size = 0x10000, scoped, tag = 'input window, operand 4, single buffered']
    #allocation9 [shape = 's32[1]{0}', space=sflag, size = 0x4, scoped, tag = 'scoped memory for tpu_custom_call.1']
    #allocation10 [shape = 'u8[65536]{0}', space=vmem, size = 0x10000, scoped, tag = 'input window, operand 6, single buffered']
    #allocation11 [shape = 'u8[65536]{0}', space=vmem, size = 0x10000, scoped, tag = 'input window, operand 8, single buffered']
    #allocation12 [shape = 's32[1]{0}', space=sflag, size = 0x4, scoped, tag = 'scoped memory for tpu_custom_call.1']
    #allocation13 [shape = 'u8[1024]{0}', space=vmem, size = 0x400, scoped, tag = 'output window, operand 0, single buffered']
    %19 = vsyncpa [#allocation3], 0
    %20 = vsyncpa [#allocation6], 0
    %21 = vsyncpa [#allocation9], 0
    %22 = vsyncpa [#allocation12], 0
    %23 = vsyncpa [#allocation4], 0
    // Predicated region
    $region2: #{tpu_custom_call.1} parent=1 // pred_check
      _
    $region3: #{tpu_custom_call.1} parent=1 // pred_check_branch
      %25 = sbr.rel (0) target = $region5
    $region4: #{tpu_custom_call.1} parent=1 // pred_region
      %s27 = ssub.s32 256, 256
      %28 = vsyncadd [#allocation3], %s27
      %s29 = sshll.u32 [#allocation2], 4
      %s30 = int_to_ptr.vmem [resolvable:$true] %s29
      %35 = dma.hbm_to_vmem [thread:$0]  %s0, 256, %s30, [#allocation3], 128, 128, 8
    $region5: #{tpu_custom_call.1} parent=1 // pred_fallthru
      _
    // Predicated region
    $region6: #{tpu_custom_call.1} parent=1 // pred_check
      _
    $region7: #{tpu_custom_call.1} parent=1 // pred_check_branch
      %37 = sbr.rel (0) target = $region9
    $region8: #{tpu_custom_call.1} parent=1 // pred_region
      %s39 = ssub.s32 128, 128
      %40 = vsyncadd [#allocation6], %s39
      %s42 = sshll.u32 [#allocation5], 4
      %s43 = int_to_ptr.vmem [resolvable:$true] %s42
      %45 = dma.hbm_to_vmem [thread:$0]  %s1, 128, %s43, [#allocation6]
    $region9: #{tpu_custom_call.1} parent=1 // pred_fallthru
      _
    // Predicated region
    $region10: #{tpu_custom_call.1} parent=1 // pred_check
      _
    $region11: #{tpu_custom_call.1} parent=1 // pred_check_branch
      %47 = sbr.rel (0) target = $region13
    $region12: #{tpu_custom_call.1} parent=1 // pred_region
      %s49 = ssub.s32 6144, 6144
      %50 = vsyncadd [#allocation6], %s49
      %s51 = sshll.u32 [#allocation7], 4
      %s52 = int_to_ptr.vmem [resolvable:$true] %s51
      %57 = dma.hbm_to_vmem [thread:$0]  %s2, 6144, %s52, [#allocation6], 384, 384, 24
    $region13: #{tpu_custom_call.1} parent=1 // pred_fallthru
      _
    // Predicated region
    $region14: #{tpu_custom_call.1} parent=1 // pred_check
      _
    $region15: #{tpu_custom_call.1} parent=1 // pred_check_branch
      %59 = sbr.rel (0) target = $region17
    $region16: #{tpu_custom_call.1} parent=1 // pred_region
      _
    $region17: #{tpu_custom_call.1} parent=1 // pred_fallthru
      _
    // Predicated region
    $region18: #{tpu_custom_call.1} parent=1 // pred_check
      _
    $region19: #{tpu_custom_call.1} parent=1 // pred_check_branch
      %61 = sbr.rel (0) target = $region21
    $region20: #{tpu_custom_call.1} parent=1 // pred_region
      %s63 = ssub.s32 2048, 2048
      %64 = vsyncadd [#allocation9], %s63
      %s65 = sshll.u32 [#allocation8], 4
      %s66 = int_to_ptr.vmem [resolvable:$true] %s65
      %71 = dma.hbm_to_vmem [thread:$0]  %s4, 2048, %s66, [#allocation9], 128, 128, 8
    $region21: #{tpu_custom_call.1} parent=1 // pred_fallthru
      _
    // Predicated region
    $region22: #{tpu_custom_call.1} parent=1 // pred_check
      _
    $region23: #{tpu_custom_call.1} parent=1 // pred_check_branch
      %73 = sbr.rel (0) target = $region25
    $region24: #{tpu_custom_call.1} parent=1 // pred_region
      _
    $region25: #{tpu_custom_call.1} parent=1 // pred_fallthru
      _
    // Predicated region
    $region26: #{tpu_custom_call.1} parent=1 // pred_check
      _
    $region27: #{tpu_custom_call.1} parent=1 // pred_check_branch
      %75 = sbr.rel (0) target = $region29
    $region28: #{tpu_custom_call.1} parent=1 // pred_region
      %s77 = ssub.s32 2048, 2048
      %78 = vsyncadd [#allocation9], %s77
      %s79 = sshll.u32 [#allocation10], 4
      %s80 = int_to_ptr.vmem [resolvable:$true] %s79
      %85 = dma.hbm_to_vmem [thread:$0]  %s6, 2048, %s80, [#allocation9], 128, 128, 8
    $region29: #{tpu_custom_call.1} parent=1 // pred_fallthru
      _
    // Predicated region
    $region30: #{tpu_custom_call.1} parent=1 // pred_check
      _
    $region31: #{tpu_custom_call.1} parent=1 // pred_check_branch
      %87 = sbr.rel (0) target = $region33
    $region32: #{tpu_custom_call.1} parent=1 // pred_region
      _
    $region33: #{tpu_custom_call.1} parent=1 // pred_fallthru
      _
    // Predicated region
    $region34: #{tpu_custom_call.1} parent=1 // pred_check
      _
    $region35: #{tpu_custom_call.1} parent=1 // pred_check_branch
      %89 = sbr.rel (0) target = $region37
    $region36: #{tpu_custom_call.1} parent=1 // pred_region
      %s91 = ssub.s32 2048, 2048
      %92 = vsyncadd [#allocation12], %s91
      %s93 = sshll.u32 [#allocation11], 4
      %s94 = int_to_ptr.vmem [resolvable:$true] %s93
      %99 = dma.hbm_to_vmem [thread:$0]  %s8, 2048, %s94, [#allocation12], 128, 128, 8
    $region37: #{tpu_custom_call.1} parent=1 // pred_fallthru
      _
    // Predicated region
    $region38: #{tpu_custom_call.1} parent=1 // pred_check
      _
    $region39: #{tpu_custom_call.1} parent=1 // pred_check_branch
      %101 = sbr.rel (0) target = $region41
    $region40: #{tpu_custom_call.1} parent=1 // pred_region
      _
    $region41: #{tpu_custom_call.1} parent=1 // pred_fallthru
      _
    // Predicated region
    $region42: #{tpu_custom_call.1} parent=1 // pred_check
      _
    $region43: #{tpu_custom_call.1} parent=1 // pred_check_branch
      %103 = sbr.rel (0) target = $region45
    $region44: #{tpu_custom_call.1} parent=1 // pred_region
      _
    $region45: #{tpu_custom_call.1} parent=1 // pred_fallthru
      _
    // Predicated region
    $region46: #{tpu_custom_call.1} parent=1 // pred_check
      _
    $region47: #{tpu_custom_call.1} parent=1 // pred_check_branch
      %105 = sbr.rel (0) target = $region49
    $region48: #{tpu_custom_call.1} parent=1 // pred_region
      _
    $region49: #{tpu_custom_call.1} parent=1 // pred_fallthru
      _
    // Predicated region
    $region50: #{tpu_custom_call.1} parent=1 // pred_check
      _
    $region51: #{tpu_custom_call.1} parent=1 // pred_check_branch
      %107 = sbr.rel (0) target = $region53
    $region52: #{tpu_custom_call.1} parent=1 // pred_region
      _
    $region53: #{tpu_custom_call.1} parent=1 // pred_fallthru
      _
    // Predicated region
    $region54: #{tpu_custom_call.1} parent=1 // pred_check
      _
    $region55: #{tpu_custom_call.1} parent=1 // pred_check_branch
      %109 = sbr.rel (0) target = $region57
    $region56: #{tpu_custom_call.1} parent=1 // pred_region
      _
    $region57: #{tpu_custom_call.1} parent=1 // pred_fallthru
      _
    // Predicated region
    $region58: #{tpu_custom_call.1} parent=1 // pred_check
      _
    $region59: #{tpu_custom_call.1} parent=1 // pred_check_branch
      %111 = sbr.rel (0) target = $region61
    $region60: #{tpu_custom_call.1} parent=1 // pred_region
      %112 = dma.done [#allocation3], 256
    $region61: #{tpu_custom_call.1} parent=1 // pred_fallthru
      _
    // Predicated region
    $region62: #{tpu_custom_call.1} parent=1 // pred_check
      _
    $region63: #{tpu_custom_call.1} parent=1 // pred_check_branch
      %114 = sbr.rel (0) target = $region65
    $region64: #{tpu_custom_call.1} parent=1 // pred_region
      %115 = dma.done [#allocation6], 128
    $region65: #{tpu_custom_call.1} parent=1 // pred_fallthru
      _
    // Predicated region
    $region66: #{tpu_custom_call.1} parent=1 // pred_check
      _
    $region67: #{tpu_custom_call.1} parent=1 // pred_check_branch
      %117 = sbr.rel (0) target = $region69
    $region68: #{tpu_custom_call.1} parent=1 // pred_region
      %118 = dma.done [#allocation6], 6144
    $region69: #{tpu_custom_call.1} parent=1 // pred_fallthru
      _
    // Predicated region
    $region70: #{tpu_custom_call.1} parent=1 // pred_check
      _
    $region71: #{tpu_custom_call.1} parent=1 // pred_check_branch
      %120 = sbr.rel (0) target = $region73
    $region72: #{tpu_custom_call.1} parent=1 // pred_region
      %121 = dma.done [#allocation9], 2048
    $region73: #{tpu_custom_call.1} parent=1 // pred_fallthru
      _
    // Predicated region
    $region74: #{tpu_custom_call.1} parent=1 // pred_check
      _
    $region75: #{tpu_custom_call.1} parent=1 // pred_check_branch
      %123 = sbr.rel (0) target = $region77
    $region76: #{tpu_custom_call.1} parent=1 // pred_region
      %124 = dma.done [#allocation9], 2048
    $region77: #{tpu_custom_call.1} parent=1 // pred_fallthru
      _
    // Predicated region
    $region78: #{tpu_custom_call.1} parent=1 // pred_check
      _
    $region79: #{tpu_custom_call.1} parent=1 // pred_check_branch
      %126 = sbr.rel (0) target = $region81
    $region80: #{tpu_custom_call.1} parent=1 // pred_region
      %127 = dma.done [#allocation12], 2048
    $region81: #{tpu_custom_call.1} parent=1 // pred_fallthru
      _
    %v128 = vlaneseq
    %v129 = vand.u32 %v128, 127
    %vm130 = vcmp.lt.s32.totalorder %v129, 32
    %v131 = vsel %vm130, 1, 0
    %v132 = vcvt.s32.f32 %v131
    %v133 = vld [vmem:[#allocation2] sm:$0xff]
    %v134 = vld [vmem:[#allocation2 + $0x8] sm:$0xff]
    %v135 = vld [vmem:[#allocation5] sm:$0xff]
    %v136 = vadd.f32 %v133, %v135
    %v137 = vadd.f32 %v134, %v135
    %v138 = vld [vmem:[#allocation7] sm:$0xff]
    %v139 = vld [vmem:[#allocation7 + $0x8] sm:$0xff]
    %v140 = vld [vmem:[#allocation7 + $0x10] sm:$0xff]
    %v141 = vld [vmem:[#allocation7 + $0x18] sm:$0xff]
    %v142 = vld [vmem:[#allocation7 + $0x20] sm:$0xff]
    %v143 = vld [vmem:[#allocation7 + $0x28] sm:$0xff]
    %v144 = vld [vmem:[#allocation7 + $0x30] sm:$0xff]
    %v145 = vld [vmem:[#allocation7 + $0x38] sm:$0xff]
    %v146 = vld [vmem:[#allocation7 + $0x40] sm:$0xff]
    %v147 = vld [vmem:[#allocation7 + $0x48] sm:$0xff]
    %v148 = vld [vmem:[#allocation7 + $0x50] sm:$0xff]
    %v149 = vld [vmem:[#allocation7 + $0x58] sm:$0xff]
    %v150 = vld [vmem:[#allocation7 + $0x60] sm:$0xff]
    %v151 = vld [vmem:[#allocation7 + $0x68] sm:$0xff]
    %v152 = vld [vmem:[#allocation7 + $0x70] sm:$0xff]
    %v153 = vld [vmem:[#allocation7 + $0x78] sm:$0xff]
    %v154 = vld [vmem:[#allocation7 + $0x80] sm:$0xff]
    %v155 = vld [vmem:[#allocation7 + $0x88] sm:$0xff]
    %v156 = vld [vmem:[#allocation7 + $0x90] sm:$0xff]
    %v157 = vld [vmem:[#allocation7 + $0x98] sm:$0xff]
    %v158 = vld [vmem:[#allocation7 + $0xa0] sm:$0xff]
    %v159 = vld [vmem:[#allocation7 + $0xa8] sm:$0xff]
    %v160 = vld [vmem:[#allocation7 + $0xb0] sm:$0xff]
    %v161 = vld [vmem:[#allocation7 + $0xb8] sm:$0xff]
    %v162 = vld [vmem:[#allocation7 + $0xc0] sm:$0xff]
    %v163 = vld [vmem:[#allocation7 + $0xc8] sm:$0xff]
    %v164 = vld [vmem:[#allocation7 + $0xd0] sm:$0xff]
    %v165 = vld [vmem:[#allocation7 + $0xd8] sm:$0xff]
    %v166 = vld [vmem:[#allocation7 + $0xe0] sm:$0xff]
    %v167 = vld [vmem:[#allocation7 + $0xe8] sm:$0xff]
    %v168 = vld [vmem:[#allocation7 + $0xf0] sm:$0xff]
    %v169 = vld [vmem:[#allocation7 + $0xf8] sm:$0xff]
    %v170 = vld [vmem:[#allocation7 + $0x100] sm:$0xff]
    %v171 = vld [vmem:[#allocation7 + $0x108] sm:$0xff]
    %v172 = vld [vmem:[#allocation7 + $0x110] sm:$0xff]
    %v173 = vld [vmem:[#allocation7 + $0x118] sm:$0xff]
    %v174 = vld [vmem:[#allocation7 + $0x120] sm:$0xff]
    %v175 = vld [vmem:[#allocation7 + $0x128] sm:$0xff]
    %v176 = vld [vmem:[#allocation7 + $0x130] sm:$0xff]
    %v177 = vld [vmem:[#allocation7 + $0x138] sm:$0xff]
    %v178 = vld [vmem:[#allocation7 + $0x140] sm:$0xff]
    %v179 = vld [vmem:[#allocation7 + $0x148] sm:$0xff]
    %v180 = vld [vmem:[#allocation7 + $0x150] sm:$0xff]
    %v181 = vld [vmem:[#allocation7 + $0x158] sm:$0xff]
    %v182 = vld [vmem:[#allocation7 + $0x160] sm:$0xff]
    %v183 = vld [vmem:[#allocation7 + $0x168] sm:$0xff]
    %v184 = vld [vmem:[#allocation7 + $0x170] sm:$0xff]
    %v185 = vld [vmem:[#allocation7 + $0x178] sm:$0xff]
    %v186 = vld [vmem:[%s3] sm:$0x7]
    %v188 = vlaneseq
    %v189 = vshrl.u32 %v188, 7
    %v190 = vsub.s32 0, %v189
    %v191 = vrot.slane %v186, %v190
    %v192 = vlaneseq
    %v193 = vshrl.u32 %v192, 7
    %v194 = vsub.s32 1, %v193
    %v195 = vrot.slane %v186, %v194
    %v196 = vlaneseq
    %v197 = vshrl.u32 %v196, 7
    %v198 = vsub.s32 2, %v197
    %v199 = vrot.slane %v186, %v198
    %203 = vmatprep.subr.mxu0 %v184
    %204 = vmatpush1.msra.mxu0 %v183
    %205 = vmatprep.subr.mxu0 %v181
    %206 = vmatpush1.msra.mxu0 %v180
    %207 = vmatprep.subr.mxu0 %v178
    %208 = vmatpush1.msra.mxu0 %v177
    %209 = vmatprep.subr.mxu0 %v175
    %210 = vmatpush1.msra.mxu0 %v174
    %211 = vmatprep.subr.mxu0 %v172
    %212 = vmatpush1.msra.mxu0 %v171
    %213 = vmatprep.subr.mxu0 %v169
    %214 = vmatpush1.msra.mxu0 %v168
    %215 = vmatprep.subr.mxu0 %v166
    %216 = vmatpush1.msra.mxu0 %v165
    %217 = vmatprep.subr.mxu0 %v163
    %218 = vmatpush1.msra.mxu0 %v162
    %219 = vmatprep.subr.mxu0 %v160
    %220 = vmatpush1.msra.mxu0 %v159
    %221 = vmatprep.subr.mxu0 %v157
    %222 = vmatpush1.msra.mxu0 %v156
    %223 = vmatprep.subr.mxu0 %v154
    %224 = vmatpush1.msra.mxu0 %v153
    %225 = vmatprep.subr.mxu0 %v151
    %226 = vmatpush1.msra.mxu0 %v150
    %227 = vmatprep.subr.mxu0 %v148
    %228 = vmatpush1.msra.mxu0 %v147
    %229 = vmatprep.subr.mxu0 %v145
    %230 = vmatpush1.msra.mxu0 %v144
    %231 = vmatprep.subr.mxu0 %v142
    %232 = vmatpush1.msra.mxu0 %v141
    %233 = vmatprep.subr.mxu0 %v139
    %234 = vmatpush1.msra.mxu0 %v138
    %235 = vmatprep.subr.mxu0 0.0
    %236 = vmatpush2.msra.mxu0 0.0
    %237 = vmatprep.subr.mxu0 0.0
    %238 = vmatpush2.msra.mxu0 0.0
    %239 = vmatprep.subr.mxu0 0.0
    %240 = vmatpush2.msra.mxu0 0.0
    %241 = vmatprep.subr.mxu0 0.0
    %242 = vmatpush2.msra.mxu0 0.0
    %243 = vmatprep.subr.mxu0 0.0
    %244 = vmatpush2.msra.mxu0 0.0
    %245 = vmatprep.subr.mxu0 0.0
    %246 = vmatpush2.msra.mxu0 0.0
    %247 = vmatprep.subr.mxu0 0.0
    %248 = vmatpush2.msra.mxu0 0.0
    %249 = vmatprep.subr.mxu0 0.0
    %250 = vmatpush2.msra.mxu0 0.0
    %251 = vmatprep.subr.mxu0 0.0
    %252 = vmatpush2.msra.mxu0 0.0
    %253 = vmatprep.subr.mxu0 0.0
    %254 = vmatpush2.msra.mxu0 0.0
    %255 = vmatprep.subr.mxu0 0.0
    %256 = vmatpush2.msra.mxu0 0.0
    %257 = vmatprep.subr.mxu0 0.0
    %258 = vmatpush2.msra.mxu0 0.0
    %259 = vmatprep.subr.mxu0 0.0
    %260 = vmatpush2.msra.mxu0 0.0
    %261 = vmatprep.subr.mxu0 0.0
    %262 = vmatpush2.msra.mxu0 0.0
    %263 = vmatprep.subr.mxu0 0.0
    %264 = vmatpush2.msra.mxu0 0.0
    %265 = vmatprep.subr.mxu0 0.0
    %266 = vmatpush2.msra.mxu0 0.0
    %267 = vmatprep.mubr.f32.mxu0 0.0
    %268 = vmatmul.mubr.f32.gmra.mxu0 %v136
    %v269 = vpop.f32.mrf.mxu0
    %v270 = vadd.f32 %v191, %v269
    %v271 = vpop.f32.mrf.mxu0
    %v272 = vadd.f32 %v195, %v271
    %273 = vmatprep.mubr.f32.mxu0 0.0
    %274 = vmatmul.mubr.f32.gmra.mxu0 %v137
    %v275 = vpop.f32.mrf.mxu0
    %v276 = vadd.f32 %v191, %v275
    %v277 = vpop.f32.mrf.mxu0
    %v278 = vadd.f32 %v195, %v277
    %279 = vdwg.mxu0
    %280 = vmatprep.subr.mxu0 0.0
    %281 = vmatpush1.msra.mxu0 %v185
    %282 = vmatprep.subr.mxu0 0.0
    %283 = vmatpush1.msra.mxu0 %v182
    %284 = vmatprep.subr.mxu0 0.0
    %285 = vmatpush1.msra.mxu0 %v179
    %286 = vmatprep.subr.mxu0 0.0
    %287 = vmatpush1.msra.mxu0 %v176
    %288 = vmatprep.subr.mxu0 0.0
    %289 = vmatpush1.msra.mxu0 %v173
    %290 = vmatprep.subr.mxu0 0.0
    %291 = vmatpush1.msra.mxu0 %v170
    %292 = vmatprep.subr.mxu0 0.0
    %293 = vmatpush1.msra.mxu0 %v167
    %294 = vmatprep.subr.mxu0 0.0
    %295 = vmatpush1.msra.mxu0 %v164
    %296 = vmatprep.subr.mxu0 0.0
    %297 = vmatpush1.msra.mxu0 %v161
    %298 = vmatprep.subr.mxu0 0.0
    %299 = vmatpush1.msra.mxu0 %v158
    %300 = vmatprep.subr.mxu0 0.0
    %301 = vmatpush1.msra.mxu0 %v155
    %302 = vmatprep.subr.mxu0 0.0
    %303 = vmatpush1.msra.mxu0 %v152
    %304 = vmatprep.subr.mxu0 0.0
    %305 = vmatpush1.msra.mxu0 %v149
    %306 = vmatprep.subr.mxu0 0.0
    %307 = vmatpush1.msra.mxu0 %v146
    %308 = vmatprep.subr.mxu0 0.0
    %309 = vmatpush1.msra.mxu0 %v143
    %310 = vmatprep.subr.mxu0 0.0
    %311 = vmatpush1.msra.mxu0 %v140
    %312 = vmatprep.subr.mxu0 0.0
    %313 = vmatpush2.msra.mxu0 0.0
    %314 = vmatprep.subr.mxu0 0.0
    %315 = vmatpush2.msra.mxu0 0.0
    %316 = vmatprep.subr.mxu0 0.0
    %317 = vmatpush2.msra.mxu0 0.0
    %318 = vmatprep.subr.mxu0 0.0
    %319 = vmatpush2.msra.mxu0 0.0
    %320 = vmatprep.subr.mxu0 0.0
    %321 = vmatpush2.msra.mxu0 0.0
    %322 = vmatprep.subr.mxu0 0.0
    %323 = vmatpush2.msra.mxu0 0.0
    %324 = vmatprep.subr.mxu0 0.0
    %325 = vmatpush2.msra.mxu0 0.0
    %326 = vmatprep.subr.mxu0 0.0
    %327 = vmatpush2.msra.mxu0 0.0
    %328 = vmatprep.subr.mxu0 0.0
    %329 = vmatpush2.msra.mxu0 0.0
    %330 = vmatprep.subr.mxu0 0.0
    %331 = vmatpush2.msra.mxu0 0.0
    %332 = vmatprep.subr.mxu0 0.0
    %333 = vmatpush2.msra.mxu0 0.0
    %334 = vmatprep.subr.mxu0 0.0
    %335 = vmatpush2.msra.mxu0 0.0
    %336 = vmatprep.subr.mxu0 0.0
    %337 = vmatpush2.msra.mxu0 0.0
    %338 = vmatprep.subr.mxu0 0.0
    %339 = vmatpush2.msra.mxu0 0.0
    %340 = vmatprep.subr.mxu0 0.0
    %341 = vmatpush2.msra.mxu0 0.0
    %342 = vmatprep.subr.mxu0 0.0
    %343 = vmatpush2.msra.mxu0 0.0
    %344 = vmatprep.mubr.f32.mxu0 0.0
    %345 = vmatmul.mubr.f32.gmra.mxu0 %v136
    %v346 = vpop.f32.mrf.mxu0
    %v347 = vadd.f32 %v199, %v346
    %v348 = vpop.f32.mrf.mxu0
    %349 = vmatprep.mubr.f32.mxu0 0.0
    %350 = vmatmul.mubr.f32.gmra.mxu0 %v137
    %v351 = vpop.f32.mrf.mxu0
    %v352 = vadd.f32 %v199, %v351
    %v353 = vpop.f32.mrf.mxu0
    %354 = vdwg.mxu0
    %355 = vmatprep.subr.mxu0 0.0
    %356 = vmatpush1.xpose.msra.mxu0 0.0
    %357 = vmatprep.subr.mxu0 0.0
    %358 = vmatpush1.xpose.msra.mxu0 0.0
    %359 = vmatprep.subr.mxu0 0.0
    %360 = vmatpush1.xpose.msra.mxu0 0.0
    %361 = vmatprep.subr.mxu0 0.0
    %362 = vmatpush1.xpose.msra.mxu0 0.0
    %363 = vmatprep.subr.mxu0 0.0
    %364 = vmatpush1.xpose.msra.mxu0 0.0
    %365 = vmatprep.subr.mxu0 0.0
    %366 = vmatpush1.xpose.msra.mxu0 0.0
    %367 = vmatprep.subr.mxu0 0.0
    %368 = vmatpush1.xpose.msra.mxu0 0.0
    %369 = vmatprep.subr.mxu0 0.0
    %370 = vmatpush1.xpose.msra.mxu0 0.0
    %371 = vmatprep.subr.mxu0 0.0
    %372 = vmatpush1.xpose.msra.mxu0 0.0
    %373 = vmatprep.subr.mxu0 0.0
    %374 = vmatpush1.xpose.msra.mxu0 0.0
    %375 = vmatprep.subr.mxu0 0.0
    %376 = vmatpush1.xpose.msra.mxu0 0.0
    %377 = vmatprep.subr.mxu0 0.0
    %378 = vmatpush1.xpose.msra.mxu0 0.0
    %379 = vmatprep.subr.mxu0 0.0
    %380 = vmatpush1.xpose.msra.mxu0 0.0
    %381 = vmatprep.subr.mxu0 0.0
    %382 = vmatpush1.xpose.msra.mxu0 0.0
    %383 = vmatprep.subr.mxu0 0.0
    %384 = vmatpush1.xpose.msra.mxu0 0.0
    %385 = vmatprep.subr.mxu0 0.0
    %386 = vmatpush1.xpose.msra.mxu0 %v272
    %387 = vmatprep.subr.mxu0 0.0
    %388 = vmatpush2.xpose.msra.mxu0 0.0
    %389 = vmatprep.subr.mxu0 0.0
    %390 = vmatpush2.xpose.msra.mxu0 0.0
    %391 = vmatprep.subr.mxu0 0.0
    %392 = vmatpush2.xpose.msra.mxu0 0.0
    %393 = vmatprep.subr.mxu0 0.0
    %394 = vmatpush2.xpose.msra.mxu0 0.0
    %395 = vmatprep.subr.mxu0 0.0
    %396 = vmatpush2.xpose.msra.mxu0 0.0
    %397 = vmatprep.subr.mxu0 0.0
    %398 = vmatpush2.xpose.msra.mxu0 0.0
    %399 = vmatprep.subr.mxu0 0.0
    %400 = vmatpush2.xpose.msra.mxu0 0.0
    %401 = vmatprep.subr.mxu0 0.0
    %402 = vmatpush2.xpose.msra.mxu0 0.0
    %403 = vmatprep.subr.mxu0 0.0
    %404 = vmatpush2.xpose.msra.mxu0 0.0
    %405 = vmatprep.subr.mxu0 0.0
    %406 = vmatpush2.xpose.msra.mxu0 0.0
    %407 = vmatprep.subr.mxu0 0.0
    %408 = vmatpush2.xpose.msra.mxu0 0.0
    %409 = vmatprep.subr.mxu0 0.0
    %410 = vmatpush2.xpose.msra.mxu0 0.0
    %411 = vmatprep.subr.mxu0 0.0
    %412 = vmatpush2.xpose.msra.mxu0 0.0
    %413 = vmatprep.subr.mxu0 0.0
    %414 = vmatpush2.xpose.msra.mxu0 0.0
    %415 = vmatprep.subr.mxu0 0.0
    %416 = vmatpush2.xpose.msra.mxu0 0.0
    %417 = vmatprep.subr.mxu0 0.0
    %418 = vmatpush2.xpose.msra.mxu0 0.0
    %419 = vmatprep.mubr.f32.mxu0 0.0
    %420 = vmatmul.mubr.f32.gmra.mxu0 %v270
    %v421 = vpop.f32.mrf.mxu0
    %v422 = vadd.f32 0.0, %v421
    %v423 = vpop.f32.mrf.mxu0
    %424 = vdwg.mxu0
    %425 = vmatprep.subr.mxu0 0.0
    %426 = vmatpush1.xpose.msra.mxu0 0.0
    %427 = vmatprep.subr.mxu0 0.0
    %428 = vmatpush1.xpose.msra.mxu0 0.0
    %429 = vmatprep.subr.mxu0 0.0
    %430 = vmatpush1.xpose.msra.mxu0 0.0
    %431 = vmatprep.subr.mxu0 0.0
    %432 = vmatpush1.xpose.msra.mxu0 0.0
    %433 = vmatprep.subr.mxu0 0.0
    %434 = vmatpush1.xpose.msra.mxu0 0.0
    %435 = vmatprep.subr.mxu0 0.0
    %436 = vmatpush1.xpose.msra.mxu0 0.0
    %437 = vmatprep.subr.mxu0 0.0
    %438 = vmatpush1.xpose.msra.mxu0 0.0
    %439 = vmatprep.subr.mxu0 0.0
    %440 = vmatpush1.xpose.msra.mxu0 0.0
    %441 = vmatprep.subr.mxu0 0.0
    %442 = vmatpush1.xpose.msra.mxu0 0.0
    %443 = vmatprep.subr.mxu0 0.0
    %444 = vmatpush1.xpose.msra.mxu0 0.0
    %445 = vmatprep.subr.mxu0 0.0
    %446 = vmatpush1.xpose.msra.mxu0 0.0
    %447 = vmatprep.subr.mxu0 0.0
    %448 = vmatpush1.xpose.msra.mxu0 0.0
    %449 = vmatprep.subr.mxu0 0.0
    %450 = vmatpush1.xpose.msra.mxu0 0.0
    %451 = vmatprep.subr.mxu0 0.0
    %452 = vmatpush1.xpose.msra.mxu0 0.0
    %453 = vmatprep.subr.mxu0 0.0
    %454 = vmatpush1.xpose.msra.mxu0 0.0
    %455 = vmatprep.subr.mxu0 0.0
    %456 = vmatpush1.xpose.msra.mxu0 %v278
    %457 = vmatprep.subr.mxu0 0.0
    %458 = vmatpush2.xpose.msra.mxu0 0.0
    %459 = vmatprep.subr.mxu0 0.0
    %460 = vmatpush2.xpose.msra.mxu0 0.0
    %461 = vmatprep.subr.mxu0 0.0
    %462 = vmatpush2.xpose.msra.mxu0 0.0
    %463 = vmatprep.subr.mxu0 0.0
    %464 = vmatpush2.xpose.msra.mxu0 0.0
    %465 = vmatprep.subr.mxu0 0.0
    %466 = vmatpush2.xpose.msra.mxu0 0.0
    %467 = vmatprep.subr.mxu0 0.0
    %468 = vmatpush2.xpose.msra.mxu0 0.0
    %469 = vmatprep.subr.mxu0 0.0
    %470 = vmatpush2.xpose.msra.mxu0 0.0
    %471 = vmatprep.subr.mxu0 0.0
    %472 = vmatpush2.xpose.msra.mxu0 0.0
    %473 = vmatprep.subr.mxu0 0.0
    %474 = vmatpush2.xpose.msra.mxu0 0.0
    %475 = vmatprep.subr.mxu0 0.0
    %476 = vmatpush2.xpose.msra.mxu0 0.0
    %477 = vmatprep.subr.mxu0 0.0
    %478 = vmatpush2.xpose.msra.mxu0 0.0
    %479 = vmatprep.subr.mxu0 0.0
    %480 = vmatpush2.xpose.msra.mxu0 0.0
    %481 = vmatprep.subr.mxu0 0.0
    %482 = vmatpush2.xpose.msra.mxu0 0.0
    %483 = vmatprep.subr.mxu0 0.0
    %484 = vmatpush2.xpose.msra.mxu0 0.0
    %485 = vmatprep.subr.mxu0 0.0
    %486 = vmatpush2.xpose.msra.mxu0 0.0
    %487 = vmatprep.subr.mxu0 0.0
    %488 = vmatpush2.xpose.msra.mxu0 0.0
    %489 = vmatprep.mubr.f32.mxu0 0.0
    %490 = vmatmul.mubr.f32.gmra.mxu0 %v276
    %v491 = vpop.f32.mrf.mxu0
    %v492 = vadd.f32 0.0, %v491
    %v493 = vpop.f32.mrf.mxu0
    %494 = vdwg.mxu0
    %vm495 = vcmask 64512
    %v496 = vsel %vm495, %v422, -inf
    %497 = vmax.xlane.f32.xlu0 %v496
    %v498 = vpop.xlane.xlu0 %497
    %v499 = vsel %vm495, %v492, -inf
    %500 = vmax.xlane.f32.xlu0 %v499
    %v501 = vpop.xlane.xlu0 %500
    %v502 = vsub.f32 %v422, %v498
    %v503 = vsub.f32 %v492, %v501
    %v504 = vmul.f32 %v502, 1.442695
    %v505 = vpow.pop %v504
    %v506 = vmul.f32 %v503, 1.442695
    %v507 = vpow.pop %v506
    %v508 = vsel %vm495, %v505, 0.0
    %509 = vadd.xlane.f32.xlu0 %v508
    %v510 = vpop.xlane.xlu0 %509
    %v511 = vsel %vm495, %v507, 0.0
    %512 = vadd.xlane.f32.xlu0 %v511
    %v513 = vpop.xlane.xlu0 %512
    %v514 = vrcp.pop %v510
    %v515 = vrcp.pop %v513
    %v516 = vmul.f32 %v510, %v514
    %v517 = vmul.f32 %v513, %v515
    %v518 = vsub.f32 2.0, %v516
    %v519 = vsub.f32 2.0, %v517
    %v520 = vmul.f32 %v514, %v518
    %v521 = vmul.f32 %v515, %v519
    %v522 = vmul.f32 %v505, %v520
    %v523 = vmul.f32 %v507, %v521
    %v525 = vsel %vm495, %v522, 0
    %527 = vmatprep.subr.mxu0 0.0
    %528 = vmatpush1.msra.mxu0 0.0
    %529 = vmatprep.subr.mxu0 0.0
    %530 = vmatpush1.msra.mxu0 0.0
    %531 = vmatprep.subr.mxu0 0.0
    %532 = vmatpush1.msra.mxu0 0.0
    %533 = vmatprep.subr.mxu0 0.0
    %534 = vmatpush1.msra.mxu0 0.0
    %535 = vmatprep.subr.mxu0 0.0
    %536 = vmatpush1.msra.mxu0 0.0
    %537 = vmatprep.subr.mxu0 0.0
    %538 = vmatpush1.msra.mxu0 0.0
    %539 = vmatprep.subr.mxu0 0.0
    %540 = vmatpush1.msra.mxu0 0.0
    %541 = vmatprep.subr.mxu0 0.0
    %542 = vmatpush1.msra.mxu0 0.0
    %543 = vmatprep.subr.mxu0 0.0
    %544 = vmatpush1.msra.mxu0 0.0
    %545 = vmatprep.subr.mxu0 0.0
    %546 = vmatpush1.msra.mxu0 0.0
    %547 = vmatprep.subr.mxu0 0.0
    %548 = vmatpush1.msra.mxu0 0.0
    %549 = vmatprep.subr.mxu0 0.0
    %550 = vmatpush1.msra.mxu0 0.0
    %551 = vmatprep.subr.mxu0 0.0
    %552 = vmatpush1.msra.mxu0 0.0
    %553 = vmatprep.subr.mxu0 0.0
    %554 = vmatpush1.msra.mxu0 0.0
    %555 = vmatprep.subr.mxu0 0.0
    %556 = vmatpush1.msra.mxu0 0.0
    %557 = vmatprep.subr.mxu0 0.0
    %558 = vmatpush1.msra.mxu0 %v347
    %559 = vmatprep.subr.mxu0 0.0
    %560 = vmatpush2.msra.mxu0 0.0
    %561 = vmatprep.subr.mxu0 0.0
    %562 = vmatpush2.msra.mxu0 0.0
    %563 = vmatprep.subr.mxu0 0.0
    %564 = vmatpush2.msra.mxu0 0.0
    %565 = vmatprep.subr.mxu0 0.0
    %566 = vmatpush2.msra.mxu0 0.0
    %567 = vmatprep.subr.mxu0 0.0
    %568 = vmatpush2.msra.mxu0 0.0
    %569 = vmatprep.subr.mxu0 0.0
    %570 = vmatpush2.msra.mxu0 0.0
    %571 = vmatprep.subr.mxu0 0.0
    %572 = vmatpush2.msra.mxu0 0.0
    %573 = vmatprep.subr.mxu0 0.0
    %574 = vmatpush2.msra.mxu0 0.0
    %575 = vmatprep.subr.mxu0 0.0
    %576 = vmatpush2.msra.mxu0 0.0
    %577 = vmatprep.subr.mxu0 0.0
    %578 = vmatpush2.msra.mxu0 0.0
    %579 = vmatprep.subr.mxu0 0.0
    %580 = vmatpush2.msra.mxu0 0.0
    %581 = vmatprep.subr.mxu0 0.0
    %582 = vmatpush2.msra.mxu0 0.0
    %583 = vmatprep.subr.mxu0 0.0
    %584 = vmatpush2.msra.mxu0 0.0
    %585 = vmatprep.subr.mxu0 0.0
    %586 = vmatpush2.msra.mxu0 0.0
    %587 = vmatprep.subr.mxu0 0.0
    %588 = vmatpush2.msra.mxu0 0.0
    %589 = vmatprep.subr.mxu0 0.0
    %590 = vmatpush2.msra.mxu0 0.0
    %591 = vmatprep.mubr.f32.mxu0 0.0
    %592 = vmatmul.mubr.f32.gmra.mxu0 %v525
    %v593 = vpop.f32.mrf.mxu0
    %v594 = vadd.f32 0.0, %v593
    %v595 = vpop.f32.mrf.mxu0
    %596 = vdwg.mxu0
    %v598 = vsel %vm495, %v523, 0
    %600 = vmatprep.subr.mxu0 0.0
    %601 = vmatpush1.msra.mxu0 0.0
    %602 = vmatprep.subr.mxu0 0.0
    %603 = vmatpush1.msra.mxu0 0.0
    %604 = vmatprep.subr.mxu0 0.0
    %605 = vmatpush1.msra.mxu0 0.0
    %606 = vmatprep.subr.mxu0 0.0
    %607 = vmatpush1.msra.mxu0 0.0
    %608 = vmatprep.subr.mxu0 0.0
    %609 = vmatpush1.msra.mxu0 0.0
    %610 = vmatprep.subr.mxu0 0.0
    %611 = vmatpush1.msra.mxu0 0.0
    %612 = vmatprep.subr.mxu0 0.0
    %613 = vmatpush1.msra.mxu0 0.0
    %614 = vmatprep.subr.mxu0 0.0
    %615 = vmatpush1.msra.mxu0 0.0
    %616 = vmatprep.subr.mxu0 0.0
    %617 = vmatpush1.msra.mxu0 0.0
    %618 = vmatprep.subr.mxu0 0.0
    %619 = vmatpush1.msra.mxu0 0.0
    %620 = vmatprep.subr.mxu0 0.0
    %621 = vmatpush1.msra.mxu0 0.0
    %622 = vmatprep.subr.mxu0 0.0
    %623 = vmatpush1.msra.mxu0 0.0
    %624 = vmatprep.subr.mxu0 0.0
    %625 = vmatpush1.msra.mxu0 0.0
    %626 = vmatprep.subr.mxu0 0.0
    %627 = vmatpush1.msra.mxu0 0.0
    %628 = vmatprep.subr.mxu0 0.0
    %629 = vmatpush1.msra.mxu0 0.0
    %630 = vmatprep.subr.mxu0 0.0
    %631 = vmatpush1.msra.mxu0 %v352
    %632 = vmatprep.subr.mxu0 0.0
    %633 = vmatpush2.msra.mxu0 0.0
    %634 = vmatprep.subr.mxu0 0.0
    %635 = vmatpush2.msra.mxu0 0.0
    %636 = vmatprep.subr.mxu0 0.0
    %637 = vmatpush2.msra.mxu0 0.0
    %638 = vmatprep.subr.mxu0 0.0
    %639 = vmatpush2.msra.mxu0 0.0
    %640 = vmatprep.subr.mxu0 0.0
    %641 = vmatpush2.msra.mxu0 0.0
    %642 = vmatprep.subr.mxu0 0.0
    %643 = vmatpush2.msra.mxu0 0.0
    %644 = vmatprep.subr.mxu0 0.0
    %645 = vmatpush2.msra.mxu0 0.0
    %646 = vmatprep.subr.mxu0 0.0
    %647 = vmatpush2.msra.mxu0 0.0
    %648 = vmatprep.subr.mxu0 0.0
    %649 = vmatpush2.msra.mxu0 0.0
    %650 = vmatprep.subr.mxu0 0.0
    %651 = vmatpush2.msra.mxu0 0.0
    %652 = vmatprep.subr.mxu0 0.0
    %653 = vmatpush2.msra.mxu0 0.0
    %654 = vmatprep.subr.mxu0 0.0
    %655 = vmatpush2.msra.mxu0 0.0
    %656 = vmatprep.subr.mxu0 0.0
    %657 = vmatpush2.msra.mxu0 0.0
    %658 = vmatprep.subr.mxu0 0.0
    %659 = vmatpush2.msra.mxu0 0.0
    %660 = vmatprep.subr.mxu0 0.0
    %661 = vmatpush2.msra.mxu0 0.0
    %662 = vmatprep.subr.mxu0 0.0
    %663 = vmatpush2.msra.mxu0 0.0
    %664 = vmatprep.mubr.f32.mxu0 0.0
    %665 = vmatmul.mubr.f32.gmra.mxu0 %v598
    %v666 = vpop.f32.mrf.mxu0
    %v667 = vadd.f32 0.0, %v666
    %v668 = vpop.f32.mrf.mxu0
    %669 = vdwg.mxu0
    %v670 = vld [vmem:[#allocation8] sm:$0xff]
    %v671 = vld [vmem:[#allocation8 + $0x8] sm:$0xff]
    %v672 = vld [vmem:[#allocation8 + $0x10] sm:$0xff]
    %v673 = vld [vmem:[#allocation8 + $0x18] sm:$0xff]
    %v674 = vld [vmem:[#allocation8 + $0x20] sm:$0xff]
    %v675 = vld [vmem:[#allocation8 + $0x28] sm:$0xff]
    %v676 = vld [vmem:[#allocation8 + $0x30] sm:$0xff]
    %v677 = vld [vmem:[#allocation8 + $0x38] sm:$0xff]
    %v678 = vld [vmem:[#allocation8 + $0x40] sm:$0xff]
    %v679 = vld [vmem:[#allocation8 + $0x48] sm:$0xff]
    %v680 = vld [vmem:[#allocation8 + $0x50] sm:$0xff]
    %v681 = vld [vmem:[#allocation8 + $0x58] sm:$0xff]
    %v682 = vld [vmem:[#allocation8 + $0x60] sm:$0xff]
    %v683 = vld [vmem:[#allocation8 + $0x68] sm:$0xff]
    %v684 = vld [vmem:[#allocation8 + $0x70] sm:$0xff]
    %v685 = vld [vmem:[#allocation8 + $0x78] sm:$0xff]
    %v686 = vld [vmem:[%s5] sm:$0x1]
    %v688 = vlaneseq
    %v689 = vshrl.u32 %v688, 7
    %v690 = vsub.s32 0, %v689
    %v691 = vrot.slane %v686, %v690
    %693 = vmatprep.subr.mxu0 0.0
    %694 = vmatpush1.msra.mxu0 %v685
    %695 = vmatprep.subr.mxu0 0.0
    %696 = vmatpush1.msra.mxu0 %v684
    %697 = vmatprep.subr.mxu0 0.0
    %698 = vmatpush1.msra.mxu0 %v683
    %699 = vmatprep.subr.mxu0 0.0
    %700 = vmatpush1.msra.mxu0 %v682
    %701 = vmatprep.subr.mxu0 0.0
    %702 = vmatpush1.msra.mxu0 %v681
    %703 = vmatprep.subr.mxu0 0.0
    %704 = vmatpush1.msra.mxu0 %v680
    %705 = vmatprep.subr.mxu0 0.0
    %706 = vmatpush1.msra.mxu0 %v679
    %707 = vmatprep.subr.mxu0 0.0
    %708 = vmatpush1.msra.mxu0 %v678
    %709 = vmatprep.subr.mxu0 0.0
    %710 = vmatpush1.msra.mxu0 %v677
    %711 = vmatprep.subr.mxu0 0.0
    %712 = vmatpush1.msra.mxu0 %v676
    %713 = vmatprep.subr.mxu0 0.0
    %714 = vmatpush1.msra.mxu0 %v675
    %715 = vmatprep.subr.mxu0 0.0
    %716 = vmatpush1.msra.mxu0 %v674
    %717 = vmatprep.subr.mxu0 0.0
    %718 = vmatpush1.msra.mxu0 %v673
    %719 = vmatprep.subr.mxu0 0.0
    %720 = vmatpush1.msra.mxu0 %v672
    %721 = vmatprep.subr.mxu0 0.0
    %722 = vmatpush1.msra.mxu0 %v671
    %723 = vmatprep.subr.mxu0 0.0
    %724 = vmatpush1.msra.mxu0 %v670
    %725 = vmatprep.subr.mxu0 0.0
    %726 = vmatpush2.msra.mxu0 0.0
    %727 = vmatprep.subr.mxu0 0.0
    %728 = vmatpush2.msra.mxu0 0.0
    %729 = vmatprep.subr.mxu0 0.0
    %730 = vmatpush2.msra.mxu0 0.0
    %731 = vmatprep.subr.mxu0 0.0
    %732 = vmatpush2.msra.mxu0 0.0
    %733 = vmatprep.subr.mxu0 0.0
    %734 = vmatpush2.msra.mxu0 0.0
    %735 = vmatprep.subr.mxu0 0.0
    %736 = vmatpush2.msra.mxu0 0.0
    %737 = vmatprep.subr.mxu0 0.0
    %738 = vmatpush2.msra.mxu0 0.0
    %739 = vmatprep.subr.mxu0 0.0
    %740 = vmatpush2.msra.mxu0 0.0
    %741 = vmatprep.subr.mxu0 0.0
    %742 = vmatpush2.msra.mxu0 0.0
    %743 = vmatprep.subr.mxu0 0.0
    %744 = vmatpush2.msra.mxu0 0.0
    %745 = vmatprep.subr.mxu0 0.0
    %746 = vmatpush2.msra.mxu0 0.0
    %747 = vmatprep.subr.mxu0 0.0
    %748 = vmatpush2.msra.mxu0 0.0
    %749 = vmatprep.subr.mxu0 0.0
    %750 = vmatpush2.msra.mxu0 0.0
    %751 = vmatprep.subr.mxu0 0.0
    %752 = vmatpush2.msra.mxu0 0.0
    %753 = vmatprep.subr.mxu0 0.0
    %754 = vmatpush2.msra.mxu0 0.0
    %755 = vmatprep.subr.mxu0 0.0
    %756 = vmatpush2.msra.mxu0 0.0
    %757 = vmatprep.mubr.f32.mxu0 0.0
    %758 = vmatmul.mubr.f32.gmra.mxu0 %v594
    %v759 = vpop.f32.mrf.mxu0
    %v760 = vadd.f32 %v691, %v759
    %v761 = vpop.f32.mrf.mxu0
    %762 = vmatprep.mubr.f32.mxu0 0.0
    %763 = vmatmul.mubr.f32.gmra.mxu0 %v667
    %v764 = vpop.f32.mrf.mxu0
    %v765 = vadd.f32 %v691, %v764
    %v766 = vpop.f32.mrf.mxu0
    %767 = vdwg.mxu0
    %v768 = vadd.f32 %v136, %v760
    %v769 = vadd.f32 %v137, %v765
    %v770 = vld [vmem:[%s10] sm:$0x1]
    %v771 = vld [vmem:[%s11] sm:$0x1]
    %772 = vadd.xlane.f32.xlu0 %v768
    %v773 = vpop.xlane.xlu0 %772
    %774 = vadd.xlane.f32.xlu0 %v769
    %v775 = vpop.xlane.xlu0 %774
    %v776 = vmul.f32 %v773, 0.03125
    %v777 = vmul.f32 %v775, 0.03125
    %v778 = vsub.f32 %v768, %v776
    %v779 = vsub.f32 %v769, %v777
    %v780 = vmul.f32 %v778, %v132
    %v781 = vmul.f32 %v779, %v132
    %v782 = vmul.f32 %v780, %v780
    %v783 = vmul.f32 %v781, %v781
    %784 = vadd.xlane.f32.xlu0 %v782
    %v785 = vpop.xlane.xlu0 %784
    %786 = vadd.xlane.f32.xlu0 %v783
    %v787 = vpop.xlane.xlu0 %786
    %v788 = vmul.f32 %v785, 0.03125
    %v789 = vmul.f32 %v787, 0.03125
    %v790 = vadd.f32 %v788, 1e-05
    %v791 = vadd.f32 %v789, 1e-05
    %v792 = vrsqrt.pop %v790
    %v793 = vrsqrt.pop %v791
    %v794 = vmul.f32 %v780, %v792
    %v795 = vmul.f32 %v781, %v793
    %v797 = vlaneseq
    %v798 = vshrl.u32 %v797, 7
    %v799 = vsub.s32 0, %v798
    %v800 = vrot.slane %v770, %v799
    %v802 = vmul.f32 %v794, %v800
    %v803 = vmul.f32 %v795, %v800
    %v805 = vlaneseq
    %v806 = vshrl.u32 %v805, 7
    %v807 = vsub.s32 0, %v806
    %v808 = vrot.slane %v771, %v807
    %v810 = vadd.f32 %v802, %v808
    %v811 = vadd.f32 %v803, %v808
    %v812 = vld [vmem:[#allocation10] sm:$0xff]
    %v813 = vld [vmem:[#allocation10 + $0x8] sm:$0xff]
    %v814 = vld [vmem:[#allocation10 + $0x10] sm:$0xff]
    %v815 = vld [vmem:[#allocation10 + $0x18] sm:$0xff]
    %v816 = vld [vmem:[#allocation10 + $0x20] sm:$0xff]
    %v817 = vld [vmem:[#allocation10 + $0x28] sm:$0xff]
    %v818 = vld [vmem:[#allocation10 + $0x30] sm:$0xff]
    %v819 = vld [vmem:[#allocation10 + $0x38] sm:$0xff]
    %v820 = vld [vmem:[#allocation10 + $0x40] sm:$0xff]
    %v821 = vld [vmem:[#allocation10 + $0x48] sm:$0xff]
    %v822 = vld [vmem:[#allocation10 + $0x50] sm:$0xff]
    %v823 = vld [vmem:[#allocation10 + $0x58] sm:$0xff]
    %v824 = vld [vmem:[#allocation10 + $0x60] sm:$0xff]
    %v825 = vld [vmem:[#allocation10 + $0x68] sm:$0xff]
    %v826 = vld [vmem:[#allocation10 + $0x70] sm:$0xff]
    %v827 = vld [vmem:[#allocation10 + $0x78] sm:$0xff]
    %v828 = vld [vmem:[%s7] sm:$0x1]
    %v830 = vlaneseq
    %v831 = vshrl.u32 %v830, 7
    %v832 = vsub.s32 0, %v831
    %v833 = vrot.slane %v828, %v832
    %835 = vmatprep.subr.mxu0 0.0
    %836 = vmatpush1.msra.mxu0 %v827
    %837 = vmatprep.subr.mxu0 0.0
    %838 = vmatpush1.msra.mxu0 %v826
    %839 = vmatprep.subr.mxu0 0.0
    %840 = vmatpush1.msra.mxu0 %v825
    %841 = vmatprep.subr.mxu0 0.0
    %842 = vmatpush1.msra.mxu0 %v824
    %843 = vmatprep.subr.mxu0 0.0
    %844 = vmatpush1.msra.mxu0 %v823
    %845 = vmatprep.subr.mxu0 0.0
    %846 = vmatpush1.msra.mxu0 %v822
    %847 = vmatprep.subr.mxu0 0.0
    %848 = vmatpush1.msra.mxu0 %v821
    %849 = vmatprep.subr.mxu0 0.0
    %850 = vmatpush1.msra.mxu0 %v820
    %851 = vmatprep.subr.mxu0 0.0
    %852 = vmatpush1.msra.mxu0 %v819
    %853 = vmatprep.subr.mxu0 0.0
    %854 = vmatpush1.msra.mxu0 %v818
    %855 = vmatprep.subr.mxu0 0.0
    %856 = vmatpush1.msra.mxu0 %v817
    %857 = vmatprep.subr.mxu0 0.0
    %858 = vmatpush1.msra.mxu0 %v816
    %859 = vmatprep.subr.mxu0 0.0
    %860 = vmatpush1.msra.mxu0 %v815
    %861 = vmatprep.subr.mxu0 0.0
    %862 = vmatpush1.msra.mxu0 %v814
    %863 = vmatprep.subr.mxu0 0.0
    %864 = vmatpush1.msra.mxu0 %v813
    %865 = vmatprep.subr.mxu0 0.0
    %866 = vmatpush1.msra.mxu0 %v812
    %867 = vmatprep.subr.mxu0 0.0
    %868 = vmatpush2.msra.mxu0 0.0
    %869 = vmatprep.subr.mxu0 0.0
    %870 = vmatpush2.msra.mxu0 0.0
    %871 = vmatprep.subr.mxu0 0.0
    %872 = vmatpush2.msra.mxu0 0.0
    %873 = vmatprep.subr.mxu0 0.0
    %874 = vmatpush2.msra.mxu0 0.0
    %875 = vmatprep.subr.mxu0 0.0
    %876 = vmatpush2.msra.mxu0 0.0
    %877 = vmatprep.subr.mxu0 0.0
    %878 = vmatpush2.msra.mxu0 0.0
    %879 = vmatprep.subr.mxu0 0.0
    %880 = vmatpush2.msra.mxu0 0.0
    %881 = vmatprep.subr.mxu0 0.0
    %882 = vmatpush2.msra.mxu0 0.0
    %883 = vmatprep.subr.mxu0 0.0
    %884 = vmatpush2.msra.mxu0 0.0
    %885 = vmatprep.subr.mxu0 0.0
    %886 = vmatpush2.msra.mxu0 0.0
    %887 = vmatprep.subr.mxu0 0.0
    %888 = vmatpush2.msra.mxu0 0.0
    %889 = vmatprep.subr.mxu0 0.0
    %890 = vmatpush2.msra.mxu0 0.0
    %891 = vmatprep.subr.mxu0 0.0
    %892 = vmatpush2.msra.mxu0 0.0
    %893 = vmatprep.subr.mxu0 0.0
    %894 = vmatpush2.msra.mxu0 0.0
    %895 = vmatprep.subr.mxu0 0.0
    %896 = vmatpush2.msra.mxu0 0.0
    %897 = vmatprep.subr.mxu0 0.0
    %898 = vmatpush2.msra.mxu0 0.0
    %899 = vmatprep.mubr.f32.mxu0 0.0
    %900 = vmatmul.mubr.f32.gmra.mxu0 %v810
    %v901 = vpop.f32.mrf.mxu0
    %v902 = vadd.f32 %v833, %v901
    %v903 = vpop.f32.mrf.mxu0
    %904 = vmatprep.mubr.f32.mxu0 0.0
    %905 = vmatmul.mubr.f32.gmra.mxu0 %v811
    %v906 = vpop.f32.mrf.mxu0
    %v907 = vadd.f32 %v833, %v906
    %v908 = vpop.f32.mrf.mxu0
    %909 = vdwg.mxu0
    %v910 = vmax.f32 %v902, 0.0
    %v911 = vmax.f32 %v907, 0.0
    %v912 = vld [vmem:[#allocation11] sm:$0xff]
    %v913 = vld [vmem:[#allocation11 + $0x8] sm:$0xff]
    %v914 = vld [vmem:[#allocation11 + $0x10] sm:$0xff]
    %v915 = vld [vmem:[#allocation11 + $0x18] sm:$0xff]
    %v916 = vld [vmem:[#allocation11 + $0x20] sm:$0xff]
    %v917 = vld [vmem:[#allocation11 + $0x28] sm:$0xff]
    %v918 = vld [vmem:[#allocation11 + $0x30] sm:$0xff]
    %v919 = vld [vmem:[#allocation11 + $0x38] sm:$0xff]
    %v920 = vld [vmem:[#allocation11 + $0x40] sm:$0xff]
    %v921 = vld [vmem:[#allocation11 + $0x48] sm:$0xff]
    %v922 = vld [vmem:[#allocation11 + $0x50] sm:$0xff]
    %v923 = vld [vmem:[#allocation11 + $0x58] sm:$0xff]
    %v924 = vld [vmem:[#allocation11 + $0x60] sm:$0xff]
    %v925 = vld [vmem:[#allocation11 + $0x68] sm:$0xff]
    %v926 = vld [vmem:[#allocation11 + $0x70] sm:$0xff]
    %v927 = vld [vmem:[#allocation11 + $0x78] sm:$0xff]
    %v928 = vld [vmem:[%s9] sm:$0x1]
    %v930 = vlaneseq
    %v931 = vshrl.u32 %v930, 7
    %v932 = vsub.s32 0, %v931
    %v933 = vrot.slane %v928, %v932
    %935 = vmatprep.subr.mxu0 0.0
    %936 = vmatpush1.msra.mxu0 %v927
    %937 = vmatprep.subr.mxu0 0.0
    %938 = vmatpush1.msra.mxu0 %v926
    %939 = vmatprep.subr.mxu0 0.0
    %940 = vmatpush1.msra.mxu0 %v925
    %941 = vmatprep.subr.mxu0 0.0
    %942 = vmatpush1.msra.mxu0 %v924
    %943 = vmatprep.subr.mxu0 0.0
    %944 = vmatpush1.msra.mxu0 %v923
    %945 = vmatprep.subr.mxu0 0.0
    %946 = vmatpush1.msra.mxu0 %v922
    %947 = vmatprep.subr.mxu0 0.0
    %948 = vmatpush1.msra.mxu0 %v921
    %949 = vmatprep.subr.mxu0 0.0
    %950 = vmatpush1.msra.mxu0 %v920
    %951 = vmatprep.subr.mxu0 0.0
    %952 = vmatpush1.msra.mxu0 %v919
    %953 = vmatprep.subr.mxu0 0.0
    %954 = vmatpush1.msra.mxu0 %v918
    %955 = vmatprep.subr.mxu0 0.0
    %956 = vmatpush1.msra.mxu0 %v917
    %957 = vmatprep.subr.mxu0 0.0
    %958 = vmatpush1.msra.mxu0 %v916
    %959 = vmatprep.subr.mxu0 0.0
    %960 = vmatpush1.msra.mxu0 %v915
    %961 = vmatprep.subr.mxu0 0.0
    %962 = vmatpush1.msra.mxu0 %v914
    %963 = vmatprep.subr.mxu0 0.0
    %964 = vmatpush1.msra.mxu0 %v913
    %965 = vmatprep.subr.mxu0 0.0
    %966 = vmatpush1.msra.mxu0 %v912
    %967 = vmatprep.subr.mxu0 0.0
    %968 = vmatpush2.msra.mxu0 0.0
    %969 = vmatprep.subr.mxu0 0.0
    %970 = vmatpush2.msra.mxu0 0.0
    %971 = vmatprep.subr.mxu0 0.0
    %972 = vmatpush2.msra.mxu0 0.0
    %973 = vmatprep.subr.mxu0 0.0
    %974 = vmatpush2.msra.mxu0 0.0
    %975 = vmatprep.subr.mxu0 0.0
    %976 = vmatpush2.msra.mxu0 0.0
    %977 = vmatprep.subr.mxu0 0.0
    %978 = vmatpush2.msra.mxu0 0.0
    %979 = vmatprep.subr.mxu0 0.0
    %980 = vmatpush2.msra.mxu0 0.0
    %981 = vmatprep.subr.mxu0 0.0
    %982 = vmatpush2.msra.mxu0 0.0
    %983 = vmatprep.subr.mxu0 0.0
    %984 = vmatpush2.msra.mxu0 0.0
    %985 = vmatprep.subr.mxu0 0.0
    %986 = vmatpush2.msra.mxu0 0.0
    %987 = vmatprep.subr.mxu0 0.0
    %988 = vmatpush2.msra.mxu0 0.0
    %989 = vmatprep.subr.mxu0 0.0
    %990 = vmatpush2.msra.mxu0 0.0
    %991 = vmatprep.subr.mxu0 0.0
    %992 = vmatpush2.msra.mxu0 0.0
    %993 = vmatprep.subr.mxu0 0.0
    %994 = vmatpush2.msra.mxu0 0.0
    %995 = vmatprep.subr.mxu0 0.0
    %996 = vmatpush2.msra.mxu0 0.0
    %997 = vmatprep.subr.mxu0 0.0
    %998 = vmatpush2.msra.mxu0 0.0
    %999 = vmatprep.mubr.f32.mxu0 0.0
    %1000 = vmatmul.mubr.f32.gmra.mxu0 %v910
    %v1001 = vpop.f32.mrf.mxu0
    %v1002 = vadd.f32 %v933, %v1001
    %v1003 = vpop.f32.mrf.mxu0
    %1004 = vmatprep.mubr.f32.mxu0 0.0
    %1005 = vmatmul.mubr.f32.gmra.mxu0 %v911
    %v1006 = vpop.f32.mrf.mxu0
    %v1007 = vadd.f32 %v933, %v1006
    %v1008 = vpop.f32.mrf.mxu0
    %1009 = vdwg.mxu0
    %v1010 = vadd.f32 %v910, %v1002
    %v1011 = vadd.f32 %v911, %v1007
    %v1012 = vld [vmem:[%s12] sm:$0x1]
    %v1013 = vld [vmem:[%s13] sm:$0x1]
    %1014 = vadd.xlane.f32.xlu0 %v1010
    %v1015 = vpop.xlane.xlu0 %1014
    %1016 = vadd.xlane.f32.xlu0 %v1011
    %v1017 = vpop.xlane.xlu0 %1016
    %v1018 = vmul.f32 %v1015, 0.03125
    %v1019 = vmul.f32 %v1017, 0.03125
    %v1020 = vsub.f32 %v1010, %v1018
    %v1021 = vsub.f32 %v1011, %v1019
    %v1022 = vmul.f32 %v1020, %v132
    %v1023 = vmul.f32 %v1021, %v132
    %v1024 = vmul.f32 %v1022, %v1022
    %v1025 = vmul.f32 %v1023, %v1023
    %1026 = vadd.xlane.f32.xlu0 %v1024
    %v1027 = vpop.xlane.xlu0 %1026
    %1028 = vadd.xlane.f32.xlu0 %v1025
    %v1029 = vpop.xlane.xlu0 %1028
    %v1030 = vmul.f32 %v1027, 0.03125
    %v1031 = vmul.f32 %v1029, 0.03125
    %v1032 = vadd.f32 %v1030, 1e-05
    %v1033 = vadd.f32 %v1031, 1e-05
    %v1034 = vrsqrt.pop %v1032
    %v1035 = vrsqrt.pop %v1033
    %v1036 = vmul.f32 %v1022, %v1034
    %v1037 = vmul.f32 %v1023, %v1035
    %v1039 = vlaneseq
    %v1040 = vshrl.u32 %v1039, 7
    %v1041 = vsub.s32 0, %v1040
    %v1042 = vrot.slane %v1012, %v1041
    %v1044 = vmul.f32 %v1036, %v1042
    %v1045 = vmul.f32 %v1037, %v1042
    %v1047 = vlaneseq
    %v1048 = vshrl.u32 %v1047, 7
    %v1049 = vsub.s32 0, %v1048
    %v1050 = vrot.slane %v1013, %v1049
    %v1052 = vadd.f32 %v1044, %v1050
    %v1053 = vadd.f32 %v1045, %v1050
    %v1054 = vrot.slane %v1052, 4
    %v1055 = vadd.f32 %v1052, %v1054
    %v1056 = vrot.slane %v1055, 2
    %v1057 = vadd.f32 %v1055, %v1056
    %v1058 = vrot.slane %v1057, 1
    %v1059 = vadd.f32 %v1057, %v1058
    %v1060 = vrot.slane %v1053, 4
    %v1061 = vadd.f32 %v1053, %v1060
    %v1062 = vrot.slane %v1061, 2
    %v1063 = vadd.f32 %v1061, %v1062
    %v1064 = vrot.slane %v1063, 1
    %v1065 = vadd.f32 %v1063, %v1064
    %vm1068 = vcmask 1041409
    %v1069 = vsel %vm1068, %v1065, %v1059
    %1071 = vst [vmem:[#allocation13] sm:$0x3] %v1069
    // Predicated region
    $region82: #{tpu_custom_call.1} parent=1 // pred_check
      _
    $region83: #{tpu_custom_call.1} parent=1 // pred_check_branch
      %1073 = sbr.rel (0) target = $region85
    $region84: #{tpu_custom_call.1} parent=1 // pred_region
      %s1075 = ssub.s32 32, 32
      %1076 = vsyncadd [#allocation4], %s1075
      %s1078 = sshll.u32 [#allocation13], 4
      %s1079 = int_to_ptr.vmem [resolvable:$true] %s1078
      %1081 = dma.vmem_to_hbm [thread:$0]  %s1079, 32, %s14, [#allocation4]
    $region85: #{tpu_custom_call.1} parent=1 // pred_fallthru
      _
    // Predicated region
    $region86: #{tpu_custom_call.1} parent=1 // pred_check
      _
    $region87: #{tpu_custom_call.1} parent=1 // pred_check_branch
      %1083 = sbr.rel (0) target = $region89
    $region88: #{tpu_custom_call.1} parent=1 // pred_region
      %1084 = dma.done [#allocation4], 32
    $region89: #{tpu_custom_call.1} parent=1 // pred_fallthru
      _
    %1085 = vsyncpa [#allocation3], 1
    %1086 = vsyncpa [#allocation6], 1
    %1087 = vsyncpa [#allocation9], 1
    %1088 = vsyncpa [#allocation12], 1
    %1089 = vsyncpa [#allocation4], 1

</llo_original>
